<compile_context>
chip_gen: v7x
topology: tpu7x:2x2x1
jax: 0.10.0
libtpu: 0.0.40
codegen_flags: <defaults>
</compile_context>

<pallas_src>
import functools

import jax
import jax.numpy as jnp
from jax.experimental import pallas as pl
from jax.experimental.pallas import tpu as pltpu

BN_EPS = 1e-5  # nn.BatchNorm2d default


# ------------------------------ Pallas kernel ------------------------------- #
def _resblock_kernel(x_ref, w1_ref, w2_ref, g1_ref, be1_ref, g2_ref, be2_ref,
                     p_ref, out_ref, slab_ref, y_ref, *, n, h, w, c):
    wc = w * c
    hp = h + 2                       # per-image rows in the halo-padded slab
    m2 = n * hp - 2                  # matmul M (last image needs no trailing rows)
    inv_m = 1.0 / float(n * h * w)   # 1/(#positions per channel), compile-time const
    p_mat = p_ref[...]               # (wc, wc) per-channel reduce/broadcast mask

    # Conv-output row m of the batched slab is a real output position (image m//hp,
    # row m%hp) iff m%hp < h; the 2 rows per image boundary are discarded and must be
    # excluded from the BatchNorm statistics.
    row_id = jax.lax.broadcasted_iota(jnp.int32, (m2, wc), 0)
    valid = (row_id % hp) < h

    def conv(w_ref_):
        """3x3 'same' conv of the whole batch as ONE (m2, 3*wc)@(3*wc, wc) matmul."""
        lhs = jnp.concatenate(
            [slab_ref[pl.ds(dy, m2), :] for dy in range(3)], axis=1)
        return jnp.dot(lhs.astype(jnp.bfloat16), w_ref_[...],
                       preferred_element_type=jnp.float32)

    def batchnorm(acc, g_row, be_row):
        """Training-mode BN (biased variance) over all N*H*W positions, per channel."""
        av = jnp.where(valid, acc, 0.0)
        mean = jnp.dot(jnp.sum(av, axis=0, keepdims=True), p_mat,
                       preferred_element_type=jnp.float32) * inv_m        # (1, wc)
        cv = jnp.where(valid, acc - mean, 0.0)                            # centered
        var = jnp.dot(jnp.sum(cv * cv, axis=0, keepdims=True), p_mat,
                      preferred_element_type=jnp.float32) * inv_m         # (1, wc)
        scale = jax.lax.rsqrt(var + BN_EPS) * g_row
        return acc * scale + (be_row - mean * scale)

    # ---- build the halo-padded slab for conv1 (halo rows zeroed once, reused) ------
    slab_ref[...] = jnp.zeros_like(slab_ref)
    for i in range(n):   # TODO(synk): lax.fori_loop / grid axis for large N
        slab_ref[pl.ds(i * hp + 1, h), :] = x_ref[i]

    # ---- conv1 -> bn1 -> relu (stays in VMEM), then refill the slab for conv2 ------
    y_ref[...] = jnp.maximum(batchnorm(conv(w1_ref), g1_ref[...], be1_ref[...]), 0.0)
    for i in range(n):
        slab_ref[pl.ds(i * hp + 1, h), :] = y_ref[pl.ds(i * hp, h), :]

    # ---- conv2 -> bn2 -> +residual -> relu ------------------------------------------
    y_ref[...] = batchnorm(conv(w2_ref), g2_ref[...], be2_ref[...])
    for i in range(n):
        out_ref[i] = jnp.maximum(y_ref[pl.ds(i * hp, h), :] + x_ref[i], 0.0)


# ------------------------------- JAX glue ------------------------------------ #
def _banded_weights(w_oihw, width):
    """Conv2d weight (Cout, Cin, 3, 3) -> (3*width*Cin, width*Cout).

    Row index = dy*W*Cin + w_in*Cin + ci, col index = w_out*Cout + co.  For each dy the
    block is tri-diagonal: the dx shift and the zero padding at the W edges are folded
    into the band structure, so the kernel only needs a sublane (dy) shift."""
    cout, cin = w_oihw.shape[0], w_oihw.shape[1]
    rows = []
    for dy in range(3):
        b = jnp.zeros((width * cin, width * cout), jnp.float32)
        for dx in range(3):
            tap = jnp.transpose(w_oihw[:, :, dy, dx])              # (Cin, Cout)
            band = jnp.eye(width, k=1 - dx, dtype=jnp.float32)     # w_in = w_out + dx-1
            b = b + jnp.kron(band, tap)
        rows.append(b)
    return jnp.concatenate(rows, axis=0)


@jax.jit
def resblock_forward(x_nchw, params):
    N, C, H, W = x_nchw.shape
    WC = W * C
    # Lane-dense layout: the kernel streams (N, H, W*C) slabs with W*C == 128*k.
    assert WC % 128 == 0, "pick W*C a multiple of 128 for the lane-dense layout"
    MT = N * (H + 2)          # rows of the halo-padded slab scratch
    M2 = MT - 2               # matmul M / rows of the conv-output scratch

    # TODO(synk): for large N*H add an M-tiled grid (row tiles with a 1-row halo and
    # cross-tile BN sum/sum-sq accumulators via a second "arbitrary" pass) plus
    # dimension_semantics=("parallel", ...) so v7x's two TensorCores both work and the
    # working set stays inside v7x's 64 MiB VMEM; this fused grid-less kernel is sized
    # for small activations.
    # TODO(synk): for chained ResBlocks keep activations in the lane-dense (N,H,W*C)
    # layout between blocks; the NCHW<->NHWC transposes here only serve the standalone
    # PyTorch NCHW interface.

    x2d = jnp.transpose(x_nchw, (0, 2, 3, 1)).reshape(N, H, WC)    # NCHW -> (N,H,W*C)
    # Banded weights with the 3 dy taps stacked along the contraction dim (K = 3*W*C).
    w1s = _banded_weights(params["w1"], W).astype(jnp.bfloat16)
    w2s = _banded_weights(params["w2"], W).astype(jnp.bfloat16)
    # BN affine params tiled across the W blocks of the lane dim: lane w*C + c -> g[c].
    g1 = jnp.tile(params["g1"], W)[None, :]
    be1 = jnp.tile(params["be1"], W)[None, :]
    g2 = jnp.tile(params["g2"], W)[None, :]
    be2 = jnp.tile(params["be2"], W)[None, :]
    # Per-channel reduction mask: P[w'*C+c', w*C+c] = 1 iff c' == c.
    p = jnp.kron(jnp.ones((W, W), jnp.float32), jnp.eye(C, dtype=jnp.float32))
    # NOTE: conv biases b1/b2 are intentionally NOT passed to the kernel — training-mode
    # BatchNorm with batch statistics is invariant to a per-channel shift, so they
    # cancel exactly.  (Not valid for eval-mode BN / running statistics.)
    # NOTE: the running_mean/var buffer updates of a real BatchNorm2d training step are
    # not produced; this is the forward activation path only.

    vmem = pl.BlockSpec(memory_space=pltpu.MemorySpace.VMEM)
    kernel = functools.partial(_resblock_kernel, n=N, h=H, w=W, c=C)

    flops = 2 * (2 * M2 * (3 * WC) * WC)                 # two K-stacked conv matmuls
    bytes_accessed = (2 * N * H * WC) * 4 + (w1s.size + w2s.size) * 2 + p.size * 4
    vmem_need = ((2 * N * H * WC) * 4 + (MT + M2) * WC * 4
                 + (w1s.size + w2s.size) * 2 + p.size * 4 + 8 * WC * 4)

    out2d = pl.pallas_call(
        kernel,
        out_shape=jax.ShapeDtypeStruct((N, H, WC), jnp.float32),
        in_specs=[vmem] * 8,
        out_specs=vmem,
        scratch_shapes=[pltpu.VMEM((MT, WC), jnp.float32),   # halo-padded slab
                        pltpu.VMEM((M2, WC), jnp.float32)],  # conv/bn staging
        compiler_params=pltpu.CompilerParams(
            vmem_limit_bytes=int(max(16 * 2 ** 20, 4 * vmem_need))),
        cost_estimate=pl.CostEstimate(flops=int(flops), transcendentals=0,
                                      bytes_accessed=int(bytes_accessed)),
    )(x2d, w1s, w2s, g1, be1, g2, be2, p)
    return jnp.transpose(out2d.reshape(N, H, W, C), (0, 3, 1, 2))  # back to NCHW


# ---------------------------- pure-JAX reference ------------------------------ #
def ref_forward(x, params):
    hi = jax.lax.Precision.HIGHEST

    def conv(z, w, b):
        y = jax.lax.conv_general_dilated(
            z, w, window_strides=(1, 1), padding=((1, 1), (1, 1)),
            dimension_numbers=("NCHW", "OIHW", "NCHW"), precision=hi)
        return y + b[None, :, None, None]

    def bn(y, g, be):
        mean = jnp.mean(y, axis=(0, 2, 3), keepdims=True)
        var = jnp.mean((y - mean) ** 2, axis=(0, 2, 3), keepdims=True)
        return ((y - mean) * jax.lax.rsqrt(var + BN_EPS)
                * g[None, :, None, None] + be[None, :, None, None])

    out = jnp.maximum(bn(conv(x, params["w1"], params["b1"]),
                         params["g1"], params["be1"]), 0.0)
    out = bn(conv(out, params["w2"], params["b2"]),
             params["g2"], params["be2"]) + x
    return jnp.maximum(out, 0.0)


# ----------------------------------- main ------------------------------------- #
if __name__ == "__main__":
    # ResBlock(features=8), batch=2, spatial 16x16  ->  W*C = 128 (lane dense).
    N, C, H, W = 2, 8, 16, 16
    key = jax.random.PRNGKey(0)
    kx, kw1, kb1, kw2, kb2 = jax.random.split(key, 5)
    fan_in = 9 * C

    params = {
        "w1": jax.random.normal(kw1, (C, C, 3, 3), jnp.float32) / jnp.sqrt(fan_in),
        "b1": jax.random.normal(kb1, (C,), jnp.float32) * 0.05,
        "g1": jnp.ones((C,), jnp.float32),    # nn.BatchNorm2d default weight
        "be1": jnp.zeros((C,), jnp.float32),  # nn.BatchNorm2d default bias
        "w2": jax.random.normal(kw2, (C, C, 3, 3), jnp.float32) / jnp.sqrt(fan_in),
        "b2": jax.random.normal(kb2, (C,), jnp.float32) * 0.05,
        "g2": jnp.ones((C,), jnp.float32),
        "be2": jnp.zeros((C,), jnp.float32),
    }
    x = jax.random.normal(kx, (N, C, H, W), jnp.float32)

    out = jax.block_until_ready(resblock_forward(x, params))
    ref = jax.block_until_ready(ref_forward(x, params))

    assert out.shape == x.shape and out.dtype == x.dtype
    # bf16 MXU inputs (f32 accumulation / f32 BN stats) vs. f32-HIGHEST reference.
    if not jnp.allclose(out, ref, rtol=2e-2, atol=2e-2):
        err = float(jnp.max(jnp.abs(out - ref)))
        raise AssertionError(f"Pallas ResBlock mismatch vs reference (max abs err {err})")
    print("KERNEL_OK")
</pallas_src>

<mosaic_0001>
module attributes {stable_mosaic.version = 11 : i64} {
  func.func @_resblock_kernel(%arg0: memref<2x16x128xf32, #tpu.memory_space<vmem>>, %arg1: memref<384x128xbf16, #tpu.memory_space<vmem>>, %arg2: memref<384x128xbf16, #tpu.memory_space<vmem>>, %arg3: memref<1x128xf32, #tpu.memory_space<vmem>>, %arg4: memref<1x128xf32, #tpu.memory_space<vmem>>, %arg5: memref<1x128xf32, #tpu.memory_space<vmem>>, %arg6: memref<1x128xf32, #tpu.memory_space<vmem>>, %arg7: memref<128x128xf32, #tpu.memory_space<vmem>>, %arg8: memref<2x16x128xf32, #tpu.memory_space<vmem>>, %arg9: memref<36x128xf32, #tpu.memory_space<vmem>>, %arg10: memref<34x128xf32, #tpu.memory_space<vmem>>) attributes {dimension_semantics = [], scalar_prefetch = 0 : i64, scratch_operands = 2 : i64, tpu.core_type = #tpu.core_type<tc>} {
    %c0 = arith.constant 0 : index
    %c0_0 = arith.constant 0 : index
    %0 = vector.load %arg7[%c0, %c0_0] : memref<128x128xf32, #tpu.memory_space<vmem>>, vector<128x128xf32>
    %1 = tpu.iota {dimensions = array<i32: 0>} : vector<34x128xi32>
    %c18_i32 = arith.constant 18 : i32
    %c0_i32 = arith.constant 0 : i32
    %2 = arith.cmpi eq, %c18_i32, %c0_i32 : i32
    %c1_i32 = arith.constant 1 : i32
    %3 = arith.select %2, %c1_i32, %c18_i32 : i32
    %4 = vector.broadcast %3 : i32 to vector<34x128xi32>
    %5 = arith.remsi %1, %4 : vector<34x128xi32>
    %c0_i32_1 = arith.constant 0 : i32
    %6 = vector.broadcast %c0_i32_1 : i32 to vector<34x128xi32>
    %7 = arith.cmpi ne, %5, %6 : vector<34x128xi32>
    %c0_i32_2 = arith.constant 0 : i32
    %8 = vector.broadcast %c0_i32_2 : i32 to vector<34x128xi32>
    %9 = arith.cmpi slt, %5, %8 : vector<34x128xi32>
    %c0_i32_3 = arith.constant 0 : i32
    %10 = arith.cmpi slt, %3, %c0_i32_3 : i32
    %11 = vector.broadcast %10 : i1 to vector<34x128xi1>
    %12 = vector.broadcast %11 : vector<34x128xi1> to vector<34x128xi1>
    %13 = arith.xori %9, %12 : vector<34x128xi1>
    %14 = arith.andi %13, %7 : vector<34x128xi1>
    %15 = vector.broadcast %3 : i32 to vector<34x128xi32>
    %16 = arith.addi %5, %15 : vector<34x128xi32>
    %17 = arith.select %14, %16, %5 : vector<34x128xi1>, vector<34x128xi32>
    %c16_i32 = arith.constant 16 : i32
    %18 = vector.broadcast %c16_i32 : i32 to vector<34x128xi32>
    %19 = arith.cmpi slt, %17, %18 : vector<34x128xi32>
    %cst = arith.constant 0.000000e+00 : f32
    %20 = vector.broadcast %cst : f32 to vector<36x128xf32>
    %c0_4 = arith.constant 0 : index
    %c0_5 = arith.constant 0 : index
    %21 = vector.load %arg9[%c0_4, %c0_5] : memref<36x128xf32, #tpu.memory_space<vmem>>, vector<36x128xf32>
    tpu.vector_store %arg9[%c0_4, %c0_5], %20 {strides = array<i32>} : memref<36x128xf32, #tpu.memory_space<vmem>>, vector<36x128xf32>,
    %c0_6 = arith.constant 0 : index
    %c0_7 = arith.constant 0 : index
    %c0_8 = arith.constant 0 : index
    %22 = vector.load %arg0[%c0_6, %c0_7, %c0_8] : memref<2x16x128xf32, #tpu.memory_space<vmem>>, vector<1x16x128xf32>
    %23 = vector.shape_cast %22 : vector<1x16x128xf32> to vector<16x128xf32>
    %c1 = arith.constant 1 : index
    %c0_9 = arith.constant 0 : index
    %24 = vector.load %arg9[%c1, %c0_9] : memref<36x128xf32, #tpu.memory_space<vmem>>, vector<16x128xf32>
    tpu.vector_store %arg9[%c1, %c0_9], %23 {strides = array<i32>} : memref<36x128xf32, #tpu.memory_space<vmem>>, vector<16x128xf32>,
    %c1_10 = arith.constant 1 : index
    %c0_11 = arith.constant 0 : index
    %c0_12 = arith.constant 0 : index
    %25 = vector.load %arg0[%c1_10, %c0_11, %c0_12] : memref<2x16x128xf32, #tpu.memory_space<vmem>>, vector<1x16x128xf32>
    %26 = vector.shape_cast %25 : vector<1x16x128xf32> to vector<16x128xf32>
    %c19 = arith.constant 19 : index
    %c0_13 = arith.constant 0 : index
    %27 = vector.load %arg9[%c19, %c0_13] : memref<36x128xf32, #tpu.memory_space<vmem>>, vector<16x128xf32>
    tpu.vector_store %arg9[%c19, %c0_13], %26 {strides = array<i32>} : memref<36x128xf32, #tpu.memory_space<vmem>>, vector<16x128xf32>,
    %c0_14 = arith.constant 0 : index
    %c0_15 = arith.constant 0 : index
    %28 = vector.load %arg9[%c0_14, %c0_15] : memref<36x128xf32, #tpu.memory_space<vmem>>, vector<34x128xf32>
    %c1_16 = arith.constant 1 : index
    %c0_17 = arith.constant 0 : index
    %29 = vector.load %arg9[%c1_16, %c0_17] : memref<36x128xf32, #tpu.memory_space<vmem>>, vector<34x128xf32>
    %c2 = arith.constant 2 : index
    %c0_18 = arith.constant 0 : index
    %30 = vector.load %arg9[%c2, %c0_18] : memref<36x128xf32, #tpu.memory_space<vmem>>, vector<34x128xf32>
    %31 = tpu.concatenate %28, %29, %30 in 1 : vector<34x128xf32>, vector<34x128xf32>, vector<34x128xf32> -> vector<34x384xf32>
    %32 = arith.truncf %31 : vector<34x384xf32> to vector<34x384xbf16>
    %c0_19 = arith.constant 0 : index
    %c0_20 = arith.constant 0 : index
    %33 = vector.load %arg1[%c0_19, %c0_20] : memref<384x128xbf16, #tpu.memory_space<vmem>>, vector<384x128xbf16>
    %cst_21 = arith.constant dense<0.000000e+00> : vector<34x128xf32>
    %34 = tpu.matmul %32, %33, %cst_21 {dimension_numbers = #tpu.dot_dimension_numbers<[1], [0], [0], [1], [0, 0, 1, 1], [], []>} : vector<34x384xbf16>, vector<384x128xbf16>, vector<34x128xf32> -> vector<34x128xf32>
    %c0_22 = arith.constant 0 : index
    %c0_23 = arith.constant 0 : index
    %35 = vector.load %arg3[%c0_22, %c0_23] : memref<1x128xf32, #tpu.memory_space<vmem>>, vector<1x128xf32>
    %c0_24 = arith.constant 0 : index
    %c0_25 = arith.constant 0 : index
    %36 = vector.load %arg4[%c0_24, %c0_25] : memref<1x128xf32, #tpu.memory_space<vmem>>, vector<1x128xf32>
    %cst_26 = arith.constant 0.000000e+00 : f32
    %37 = vector.broadcast %cst_26 : f32 to vector<34x128xf32>
    %38 = arith.select %19, %34, %37 : vector<34x128xi1>, vector<34x128xf32>
    %cst_27 = arith.constant dense<0.000000e+00> : vector<128xf32>
    %39 = vector.multi_reduction <add>, %38, %cst_27 [0] : vector<34x128xf32> to vector<128xf32>
    %40 = vector.shape_cast %39 : vector<128xf32> to vector<1x128xf32>
    %cst_28 = arith.constant dense<0.000000e+00> : vector<1x128xf32>
    %41 = tpu.matmul %40, %0, %cst_28 {dimension_numbers = #tpu.dot_dimension_numbers<[1], [0], [0], [1], [0, 0, 1, 1], [], []>} : vector<1x128xf32>, vector<128x128xf32>, vector<1x128xf32> -> vector<1x128xf32>
    %cst_29 = arith.constant 0.001953125 : f32
    %42 = vector.broadcast %cst_29 : f32 to vector<1x128xf32>
    %43 = arith.mulf %41, %42 : vector<1x128xf32>
    %44 = vector.broadcast %43 : vector<1x128xf32> to vector<34x128xf32>
    %45 = arith.subf %34, %44 : vector<34x128xf32>
    %cst_30 = arith.constant 0.000000e+00 : f32
    %46 = vector.broadcast %cst_30 : f32 to vector<34x128xf32>
    %47 = arith.select %19, %45, %46 : vector<34x128xi1>, vector<34x128xf32>
    %48 = arith.mulf %47, %47 : vector<34x128xf32>
    %cst_31 = arith.constant dense<0.000000e+00> : vector<128xf32>
    %49 = vector.multi_reduction <add>, %48, %cst_31 [0] : vector<34x128xf32> to vector<128xf32>
    %50 = vector.shape_cast %49 : vector<128xf32> to vector<1x128xf32>
    %cst_32 = arith.constant dense<0.000000e+00> : vector<1x128xf32>
    %51 = tpu.matmul %50, %0, %cst_32 {dimension_numbers = #tpu.dot_dimension_numbers<[1], [0], [0], [1], [0, 0, 1, 1], [], []>} : vector<1x128xf32>, vector<128x128xf32>, vector<1x128xf32> -> vector<1x128xf32>
    %cst_33 = arith.constant 0.001953125 : f32
    %52 = vector.broadcast %cst_33 : f32 to vector<1x128xf32>
    %53 = arith.mulf %51, %52 : vector<1x128xf32>
    %cst_34 = arith.constant 9.99999974E-6 : f32
    %54 = vector.broadcast %cst_34 : f32 to vector<1x128xf32>
    %55 = arith.addf %53, %54 : vector<1x128xf32>
    %56 = math.rsqrt %55 : vector<1x128xf32>
    %57 = arith.mulf %56, %35 : vector<1x128xf32>
    %58 = vector.broadcast %57 : vector<1x128xf32> to vector<34x128xf32>
    %59 = arith.mulf %34, %58 : vector<34x128xf32>
    %60 = arith.mulf %43, %57 : vector<1x128xf32>
    %61 = arith.subf %36, %60 : vector<1x128xf32>
    %62 = vector.broadcast %61 : vector<1x128xf32> to vector<34x128xf32>
    %63 = arith.addf %59, %62 : vector<34x128xf32>
    %cst_35 = arith.constant 0.000000e+00 : f32
    %64 = vector.broadcast %cst_35 : f32 to vector<34x128xf32>
    %65 = arith.maximumf %63, %64 : vector<34x128xf32>
    %c0_36 = arith.constant 0 : index
    %c0_37 = arith.constant 0 : index
    %66 = vector.load %arg10[%c0_36, %c0_37] : memref<34x128xf32, #tpu.memory_space<vmem>>, vector<34x128xf32>
    tpu.vector_store %arg10[%c0_36, %c0_37], %65 {strides = array<i32>} : memref<34x128xf32, #tpu.memory_space<vmem>>, vector<34x128xf32>,
    %c0_38 = arith.constant 0 : index
    %c0_39 = arith.constant 0 : index
    %67 = vector.load %arg10[%c0_38, %c0_39] : memref<34x128xf32, #tpu.memory_space<vmem>>, vector<16x128xf32>
    %c1_40 = arith.constant 1 : index
    %c0_41 = arith.constant 0 : index
    %68 = vector.load %arg9[%c1_40, %c0_41] : memref<36x128xf32, #tpu.memory_space<vmem>>, vector<16x128xf32>
    tpu.vector_store %arg9[%c1_40, %c0_41], %67 {strides = array<i32>} : memref<36x128xf32, #tpu.memory_space<vmem>>, vector<16x128xf32>,
    %c18 = arith.constant 18 : index
    %c0_42 = arith.constant 0 : index
    %69 = vector.load %arg10[%c18, %c0_42] : memref<34x128xf32, #tpu.memory_space<vmem>>, vector<16x128xf32>
    %c19_43 = arith.constant 19 : index
    %c0_44 = arith.constant 0 : index
    %70 = vector.load %arg9[%c19_43, %c0_44] : memref<36x128xf32, #tpu.memory_space<vmem>>, vector<16x128xf32>
    tpu.vector_store %arg9[%c19_43, %c0_44], %69 {strides = array<i32>} : memref<36x128xf32, #tpu.memory_space<vmem>>, vector<16x128xf32>,
    %c0_45 = arith.constant 0 : index
    %c0_46 = arith.constant 0 : index
    %71 = vector.load %arg9[%c0_45, %c0_46] : memref<36x128xf32, #tpu.memory_space<vmem>>, vector<34x128xf32>
    %c1_47 = arith.constant 1 : index
    %c0_48 = arith.constant 0 : index
    %72 = vector.load %arg9[%c1_47, %c0_48] : memref<36x128xf32, #tpu.memory_space<vmem>>, vector<34x128xf32>
    %c2_49 = arith.constant 2 : index
    %c0_50 = arith.constant 0 : index
    %73 = vector.load %arg9[%c2_49, %c0_50] : memref<36x128xf32, #tpu.memory_space<vmem>>, vector<34x128xf32>
    %74 = tpu.concatenate %71, %72, %73 in 1 : vector<34x128xf32>, vector<34x128xf32>, vector<34x128xf32> -> vector<34x384xf32>
    %75 = arith.truncf %74 : vector<34x384xf32> to vector<34x384xbf16>
    %c0_51 = arith.constant 0 : index
    %c0_52 = arith.constant 0 : index
    %76 = vector.load %arg2[%c0_51, %c0_52] : memref<384x128xbf16, #tpu.memory_space<vmem>>, vector<384x128xbf16>
    %cst_53 = arith.constant dense<0.000000e+00> : vector<34x128xf32>
    %77 = tpu.matmul %75, %76, %cst_53 {dimension_numbers = #tpu.dot_dimension_numbers<[1], [0], [0], [1], [0, 0, 1, 1], [], []>} : vector<34x384xbf16>, vector<384x128xbf16>, vector<34x128xf32> -> vector<34x128xf32>
    %c0_54 = arith.constant 0 : index
    %c0_55 = arith.constant 0 : index
    %78 = vector.load %arg5[%c0_54, %c0_55] : memref<1x128xf32, #tpu.memory_space<vmem>>, vector<1x128xf32>
    %c0_56 = arith.constant 0 : index
    %c0_57 = arith.constant 0 : index
    %79 = vector.load %arg6[%c0_56, %c0_57] : memref<1x128xf32, #tpu.memory_space<vmem>>, vector<1x128xf32>
    %cst_58 = arith.constant 0.000000e+00 : f32
    %80 = vector.broadcast %cst_58 : f32 to vector<34x128xf32>
    %81 = arith.select %19, %77, %80 : vector<34x128xi1>, vector<34x128xf32>
    %cst_59 = arith.constant dense<0.000000e+00> : vector<128xf32>
    %82 = vector.multi_reduction <add>, %81, %cst_59 [0] : vector<34x128xf32> to vector<128xf32>
    %83 = vector.shape_cast %82 : vector<128xf32> to vector<1x128xf32>
    %cst_60 = arith.constant dense<0.000000e+00> : vector<1x128xf32>
    %84 = tpu.matmul %83, %0, %cst_60 {dimension_numbers = #tpu.dot_dimension_numbers<[1], [0], [0], [1], [0, 0, 1, 1], [], []>} : vector<1x128xf32>, vector<128x128xf32>, vector<1x128xf32> -> vector<1x128xf32>
    %cst_61 = arith.constant 0.001953125 : f32
    %85 = vector.broadcast %cst_61 : f32 to vector<1x128xf32>
    %86 = arith.mulf %84, %85 : vector<1x128xf32>
    %87 = vector.broadcast %86 : vector<1x128xf32> to vector<34x128xf32>
    %88 = arith.subf %77, %87 : vector<34x128xf32>
    %cst_62 = arith.constant 0.000000e+00 : f32
    %89 = vector.broadcast %cst_62 : f32 to vector<34x128xf32>
    %90 = arith.select %19, %88, %89 : vector<34x128xi1>, vector<34x128xf32>
    %91 = arith.mulf %90, %90 : vector<34x128xf32>
    %cst_63 = arith.constant dense<0.000000e+00> : vector<128xf32>
    %92 = vector.multi_reduction <add>, %91, %cst_63 [0] : vector<34x128xf32> to vector<128xf32>
    %93 = vector.shape_cast %92 : vector<128xf32> to vector<1x128xf32>
    %cst_64 = arith.constant dense<0.000000e+00> : vector<1x128xf32>
    %94 = tpu.matmul %93, %0, %cst_64 {dimension_numbers = #tpu.dot_dimension_numbers<[1], [0], [0], [1], [0, 0, 1, 1], [], []>} : vector<1x128xf32>, vector<128x128xf32>, vector<1x128xf32> -> vector<1x128xf32>
    %cst_65 = arith.constant 0.001953125 : f32
    %95 = vector.broadcast %cst_65 : f32 to vector<1x128xf32>
    %96 = arith.mulf %94, %95 : vector<1x128xf32>
    %cst_66 = arith.constant 9.99999974E-6 : f32
    %97 = vector.broadcast %cst_66 : f32 to vector<1x128xf32>
    %98 = arith.addf %96, %97 : vector<1x128xf32>
    %99 = math.rsqrt %98 : vector<1x128xf32>
    %100 = arith.mulf %99, %78 : vector<1x128xf32>
    %101 = vector.broadcast %100 : vector<1x128xf32> to vector<34x128xf32>
    %102 = arith.mulf %77, %101 : vector<34x128xf32>
    %103 = arith.mulf %86, %100 : vector<1x128xf32>
    %104 = arith.subf %79, %103 : vector<1x128xf32>
    %105 = vector.broadcast %104 : vector<1x128xf32> to vector<34x128xf32>
    %106 = arith.addf %102, %105 : vector<34x128xf32>
    %c0_67 = arith.constant 0 : index
    %c0_68 = arith.constant 0 : index
    %107 = vector.load %arg10[%c0_67, %c0_68] : memref<34x128xf32, #tpu.memory_space<vmem>>, vector<34x128xf32>
    tpu.vector_store %arg10[%c0_67, %c0_68], %106 {strides = array<i32>} : memref<34x128xf32, #tpu.memory_space<vmem>>, vector<34x128xf32>,
    %c0_69 = arith.constant 0 : index
    %c0_70 = arith.constant 0 : index
    %108 = vector.load %arg10[%c0_69, %c0_70] : memref<34x128xf32, #tpu.memory_space<vmem>>, vector<16x128xf32>
    %c0_71 = arith.constant 0 : index
    %c0_72 = arith.constant 0 : index
    %c0_73 = arith.constant 0 : index
    %109 = vector.load %arg0[%c0_71, %c0_72, %c0_73] : memref<2x16x128xf32, #tpu.memory_space<vmem>>, vector<1x16x128xf32>
    %110 = vector.shape_cast %109 : vector<1x16x128xf32> to vector<16x128xf32>
    %111 = arith.addf %108, %110 : vector<16x128xf32>
    %cst_74 = arith.constant 0.000000e+00 : f32
    %112 = vector.broadcast %cst_74 : f32 to vector<16x128xf32>
    %113 = arith.maximumf %111, %112 : vector<16x128xf32>
    %c0_75 = arith.constant 0 : index
    %c0_76 = arith.constant 0 : index
    %c0_77 = arith.constant 0 : index
    %114 = vector.load %arg8[%c0_75, %c0_76, %c0_77] : memref<2x16x128xf32, #tpu.memory_space<vmem>>, vector<1x16x128xf32>
    %115 = vector.shape_cast %114 : vector<1x16x128xf32> to vector<16x128xf32>
    %116 = vector.shape_cast %113 : vector<16x128xf32> to vector<1x16x128xf32>
    tpu.vector_store %arg8[%c0_75, %c0_76, %c0_77], %116 {strides = array<i32>} : memref<2x16x128xf32, #tpu.memory_space<vmem>>, vector<1x16x128xf32>,
    %c18_78 = arith.constant 18 : index
    %c0_79 = arith.constant 0 : index
    %117 = vector.load %arg10[%c18_78, %c0_79] : memref<34x128xf32, #tpu.memory_space<vmem>>, vector<16x128xf32>
    %c1_80 = arith.constant 1 : index
    %c0_81 = arith.constant 0 : index
    %c0_82 = arith.constant 0 : index
    %118 = vector.load %arg0[%c1_80, %c0_81, %c0_82] : memref<2x16x128xf32, #tpu.memory_space<vmem>>, vector<1x16x128xf32>
    %119 = vector.shape_cast %118 : vector<1x16x128xf32> to vector<16x128xf32>
    %120 = arith.addf %117, %119 : vector<16x128xf32>
    %cst_83 = arith.constant 0.000000e+00 : f32
    %121 = vector.broadcast %cst_83 : f32 to vector<16x128xf32>
    %122 = arith.maximumf %120, %121 : vector<16x128xf32>
    %c1_84 = arith.constant 1 : index
    %c0_85 = arith.constant 0 : index
    %c0_86 = arith.constant 0 : index
    %123 = vector.load %arg8[%c1_84, %c0_85, %c0_86] : memref<2x16x128xf32, #tpu.memory_space<vmem>>, vector<1x16x128xf32>
    %124 = vector.shape_cast %123 : vector<1x16x128xf32> to vector<16x128xf32>
    %125 = vector.shape_cast %122 : vector<16x128xf32> to vector<1x16x128xf32>
    tpu.vector_store %arg8[%c1_84, %c0_85, %c0_86], %125 {strides = array<i32>} : memref<2x16x128xf32, #tpu.memory_space<vmem>>, vector<1x16x128xf32>,
    return
  }
}

</mosaic_0001>

<llo_original>
// kernel: tile.23
$region0: #{tile.23}
  #allocation0 [shape = 's32[1]{0}', space=sflag, size = 0x4, scoped, tag = 'scoped memory for tile.23']
  %s0 = inlined_call_operand.vmem [shape: f32[8], index: 0, kind: input, shape index: {}]
  %s1 = inlined_call_operand.vmem [shape: f32[16,8], index: 1, kind: output, shape index: {}]
  // Predicated region
  $region2: #{tile.23} parent=0 // pred_check
    _
  $region3: #{tile.23} parent=0 // pred_check_branch
    %3 = sbr.rel (0) target = $region5
  $region4: #{tile.23} parent=0 // pred_region
    _
  $region5: #{tile.23} parent=0 // pred_fallthru
    _
  %v4 = vld [vmem:[%s0] ss:$0 sm:$0xff]
  %5 = vst [vmem:[%s1] sm:$0xff] %v4
  %s6 = scalar_lea.vmem %s1, 8
  %7 = vst [vmem:[%s6] sm:$0xff] %v4

// kernel: tile.24
$region0: #{tile.24}
  %s0 = inlined_call_operand.vmem [shape: f32[16,8], index: 0, kind: input, shape index: {}]
  %s1 = inlined_call_operand.vmem [shape: f32[1,128], index: 1, kind: output, shape index: {}]
  $region1: #{tile.24} parent=0
    #allocation0 [shape = 'u8[4096]{0}', space=vmem, size = 0x1000, scoped, tag = 'scoped mem for output reshape']
    %v2 = vld [vmem:[%s0] sm:$0x1]
    %vm3 = vcmask 64512
    %4 = vst.msk [vmem:[#allocation0] sm:$0x1] %vm3, %v2
    %s5 = scalar_lea.vmem %s0, 15
    %v6 = vld [vmem:[%s5] sm:$0x1]
    %7 = vrot.lane.b32.xlu0 %v6, 120
    %v8 = vpop.permute.xlu0 %7
    %vm9 = vcmask 1048512
    %10 = vst.msk [vmem:[#allocation0] sm:$0x1] %vm9, %v8
    %s11 = scalar_lea.vmem %s0, 14
    %v12 = vld [vmem:[%s11] sm:$0x1]
    %13 = vrot.lane.b32.xlu0 %v12, 112
    %v14 = vpop.permute.xlu0 %13
    %vm15 = vcmask 982912
    %16 = vst.msk [vmem:[#allocation0] sm:$0x1] %vm15, %v14
    %s17 = scalar_lea.vmem %s0, 13
    %v18 = vld [vmem:[%s17] sm:$0x1]
    %19 = vrot.lane.b32.xlu0 %v18, 104
    %v20 = vpop.permute.xlu0 %19
    %vm21 = vcmask 917312
    %22 = vst.msk [vmem:[#allocation0] sm:$0x1] %vm21, %v20
    %s23 = scalar_lea.vmem %s0, 12
    %v24 = vld [vmem:[%s23] sm:$0x1]
    %25 = vrot.lane.b32.xlu0 %v24, 96
    %v26 = vpop.permute.xlu0 %25
    %vm27 = vcmask 851712
    %28 = vst.msk [vmem:[#allocation0] sm:$0x1] %vm27, %v26
    %s29 = scalar_lea.vmem %s0, 11
    %v30 = vld [vmem:[%s29] sm:$0x1]
    %31 = vrot.lane.b32.xlu0 %v30, 88
    %v32 = vpop.permute.xlu0 %31
    %vm33 = vcmask 786112
    %34 = vst.msk [vmem:[#allocation0] sm:$0x1] %vm33, %v32
    %s35 = scalar_lea.vmem %s0, 10
    %v36 = vld [vmem:[%s35] sm:$0x1]
    %37 = vrot.lane.b32.xlu0 %v36, 80
    %v38 = vpop.permute.xlu0 %37
    %vm39 = vcmask 720512
    %40 = vst.msk [vmem:[#allocation0] sm:$0x1] %vm39, %v38
    %s41 = scalar_lea.vmem %s0, 9
    %v42 = vld [vmem:[%s41] sm:$0x1]
    %43 = vrot.lane.b32.xlu0 %v42, 72
    %v44 = vpop.permute.xlu0 %43
    %vm45 = vcmask 654912
    %46 = vst.msk [vmem:[#allocation0] sm:$0x1] %vm45, %v44
    %s47 = scalar_lea.vmem %s0, 8
    %v48 = vld [vmem:[%s47] sm:$0x1]
    %49 = vrot.lane.b32.xlu0 %v48, 64
    %v50 = vpop.permute.xlu0 %49
    %vm51 = vcmask 589312
    %52 = vst.msk [vmem:[#allocation0] sm:$0x1] %vm51, %v50
    %s53 = scalar_lea.vmem %s0, 7
    %v54 = vld [vmem:[%s53] sm:$0x1]
    %55 = vrot.lane.b32.xlu0 %v54, 56
    %v56 = vpop.permute.xlu0 %55
    %vm57 = vcmask 523712
    %58 = vst.msk [vmem:[#allocation0] sm:$0x1] %vm57, %v56
    %s59 = scalar_lea.vmem %s0, 6
    %v60 = vld [vmem:[%s59] sm:$0x1]
    %61 = vrot.lane.b32.xlu0 %v60, 48
    %v62 = vpop.permute.xlu0 %61
    %vm63 = vcmask 458112
    %64 = vst.msk [vmem:[#allocation0] sm:$0x1] %vm63, %v62
    %s65 = scalar_lea.vmem %s0, 5
    %v66 = vld [vmem:[%s65] sm:$0x1]
    %67 = vrot.lane.b32.xlu0 %v66, 40
    %v68 = vpop.permute.xlu0 %67
    %vm69 = vcmask 392512
    %70 = vst.msk [vmem:[#allocation0] sm:$0x1] %vm69, %v68
    %s71 = scalar_lea.vmem %s0, 4
    %v72 = vld [vmem:[%s71] sm:$0x1]
    %73 = vrot.lane.b32.xlu0 %v72, 32
    %v74 = vpop.permute.xlu0 %73
    %vm75 = vcmask 326912
    %76 = vst.msk [vmem:[#allocation0] sm:$0x1] %vm75, %v74
    %s77 = scalar_lea.vmem %s0, 3
    %v78 = vld [vmem:[%s77] sm:$0x1]
    %79 = vrot.lane.b32.xlu0 %v78, 24
    %v80 = vpop.permute.xlu0 %79
    %vm81 = vcmask 261312
    %82 = vst.msk [vmem:[#allocation0] sm:$0x1] %vm81, %v80
    %s83 = scalar_lea.vmem %s0, 2
    %v84 = vld [vmem:[%s83] sm:$0x1]
    %85 = vrot.lane.b32.xlu0 %v84, 16
    %v86 = vpop.permute.xlu0 %85
    %vm87 = vcmask 195712
    %88 = vst.msk [vmem:[#allocation0] sm:$0x1] %vm87, %v86
    %s89 = scalar_lea.vmem %s0, 1
    %v90 = vld [vmem:[%s89] sm:$0x1]
    %91 = vrot.lane.b32.xlu0 %v90, 8
    %v92 = vpop.permute.xlu0 %91
    %vm93 = vcmask 130112
    %94 = vst.msk [vmem:[#allocation0] sm:$0x1] %vm93, %v92
    %s96 = sshllo.u32 0, 1
    %v98 = vld [vmem:[#allocation0] sm:%s96]
    %s99 = sshllo.u32 0, 1
    %100 = vst [vmem:[%s1] sm:%s99] %v98

// kernel: resblock_forward.1
$region0: #{resblock_forward.1}
  #allocation0 [shape = 'u32[]', space=smem, size = 0x4, offset = 0x4, fixed_abs, tag = 'smem constant byte address 0x4 - core index']
  #allocation1 [shape = 'u32[144,128]{1,0:T(1,128)}', space=vmem, size = 0x12000, scoped, tag = 'internal scratch']
  #allocation2 [shape = 'f32[36,128]{1,0:T(8,128)}', space=vmem, size = 0x5000, scoped, tag = 'scratch operand']
  #allocation3 [shape = 'f32[34,128]{1,0:T(8,128)}', space=vmem, size = 0x5000, scoped, tag = 'scratch operand']
  %s0 = inlined_call_operand.vmem [shape: f32[2,16,128], index: 0, kind: input, shape index: {}]
  %s1 = inlined_call_operand.vmem [shape: bf16[384,128], index: 1, kind: input, shape index: {}]
  %s2 = inlined_call_operand.vmem [shape: bf16[384,128], index: 2, kind: input, shape index: {}]
  %s3 = inlined_call_operand.vmem [shape: f32[1,128], index: 3, kind: input, shape index: {}]
  %s4 = inlined_call_operand.vmem [shape: f32[1,128], index: 4, kind: input, shape index: {}]
  %s5 = inlined_call_operand.vmem [shape: f32[1,128], index: 5, kind: input, shape index: {}]
  %s6 = inlined_call_operand.vmem [shape: f32[1,128], index: 6, kind: input, shape index: {}]
  %s7 = inlined_call_operand.vmem [shape: f32[128,128], index: 7, kind: input, shape index: {}]
  %s8 = inlined_call_operand.vmem [shape: f32[2,16,128], index: 8, kind: output, shape index: {}]
  %s9 = sld [smem:[#allocation0]]
  $region42: #{resblock_forward.1} parent=0
    _
  %s11 = ssub.s32 1, %s9
  %s12 = scalar_select 0, %s11, %s9
  // Predicated region
  $region2: #{resblock_forward.1} parent=0 // pred_check
    _
  $region3: #{resblock_forward.1} parent=0 // pred_check_branch
    %14 = sbr.rel (0) target = $region5
  $region4: #{resblock_forward.1} parent=0 // pred_region
    _
  $region5: #{resblock_forward.1} parent=0 // pred_fallthru
    _
  // Predicated region
  $region6: #{resblock_forward.1} parent=0 // pred_check
    _
  $region7: #{resblock_forward.1} parent=0 // pred_check_branch
    %16 = sbr.rel (0) target = $region9
  $region8: #{resblock_forward.1} parent=0 // pred_region
    _
  $region9: #{resblock_forward.1} parent=0 // pred_fallthru
    _
  // Predicated region
  $region10: #{resblock_forward.1} parent=0 // pred_check
    _
  $region11: #{resblock_forward.1} parent=0 // pred_check_branch
    %18 = sbr.rel (0) target = $region13
  $region12: #{resblock_forward.1} parent=0 // pred_region
    _
  $region13: #{resblock_forward.1} parent=0 // pred_fallthru
    _
  // Predicated region
  $region14: #{resblock_forward.1} parent=0 // pred_check
    _
  $region15: #{resblock_forward.1} parent=0 // pred_check_branch
    %20 = sbr.rel (0) target = $region17
  $region16: #{resblock_forward.1} parent=0 // pred_region
    _
  $region17: #{resblock_forward.1} parent=0 // pred_fallthru
    _
  // Predicated region
  $region18: #{resblock_forward.1} parent=0 // pred_check
    _
  $region19: #{resblock_forward.1} parent=0 // pred_check_branch
    %22 = sbr.rel (0) target = $region21
  $region20: #{resblock_forward.1} parent=0 // pred_region
    _
  $region21: #{resblock_forward.1} parent=0 // pred_fallthru
    _
  // Predicated region
  $region22: #{resblock_forward.1} parent=0 // pred_check
    _
  $region23: #{resblock_forward.1} parent=0 // pred_check_branch
    %24 = sbr.rel (0) target = $region25
  $region24: #{resblock_forward.1} parent=0 // pred_region
    _
  $region25: #{resblock_forward.1} parent=0 // pred_fallthru
    _
  // Predicated region
  $region26: #{resblock_forward.1} parent=0 // pred_check
    _
  $region27: #{resblock_forward.1} parent=0 // pred_check_branch
    %26 = sbr.rel (0) target = $region29
  $region28: #{resblock_forward.1} parent=0 // pred_region
    _
  $region29: #{resblock_forward.1} parent=0 // pred_fallthru
    _
  // Predicated region
  $region30: #{resblock_forward.1} parent=0 // pred_check
    _
  $region31: #{resblock_forward.1} parent=0 // pred_check_branch
    %28 = sbr.rel (0) target = $region33
  $region32: #{resblock_forward.1} parent=0 // pred_region
    _
  $region33: #{resblock_forward.1} parent=0 // pred_fallthru
    _
  %v30 = vld [vmem:[%s7] sm:$0xff]
  %v31 = vld [vmem:[%s7 + $0x8] sm:$0xff]
  %v32 = vld [vmem:[%s7 + $0x10] sm:$0xff]
  %v33 = vld [vmem:[%s7 + $0x18] sm:$0xff]
  %v34 = vld [vmem:[%s7 + $0x20] sm:$0xff]
  %v35 = vld [vmem:[%s7 + $0x28] sm:$0xff]
  %v36 = vld [vmem:[%s7 + $0x30] sm:$0xff]
  %v37 = vld [vmem:[%s7 + $0x38] sm:$0xff]
  %v38 = vld [vmem:[%s7 + $0x40] sm:$0xff]
  %v39 = vld [vmem:[%s7 + $0x48] sm:$0xff]
  %v40 = vld [vmem:[%s7 + $0x50] sm:$0xff]
  %v41 = vld [vmem:[%s7 + $0x58] sm:$0xff]
  %v42 = vld [vmem:[%s7 + $0x60] sm:$0xff]
  %v43 = vld [vmem:[%s7 + $0x68] sm:$0xff]
  %v44 = vld [vmem:[%s7 + $0x70] sm:$0xff]
  %v45 = vld [vmem:[%s7 + $0x78] sm:$0xff]
  %v46 = vlaneseq
  %v47 = vshrl.u32 %v46, 7
  %v48 = vadd.s32 %v47, 8
  %v49 = vadd.s32 %v47, 16
  %v50 = vadd.s32 %v47, 24
  %v51 = vadd.s32 %v47, 32
  %vm52 = vcmp.lt.s32.totalorder %v47, 0
  %v53 = vsub.s32 0, %v47
  %v54 = vsel %vm52, %v53, %v47
  %v55 = vmul.u32.u64.compose %v54, 3817748708
  %v56 = vextract.low.u32 %v55
  %v57 = vextract.high.u32 %v55
  %v58 = vshrl.u32 %v57, 4
  %v59 = vmul.u32 %v58, 18
  %v60 = vsub.s32 %v54, %v59
  %v61 = vsub.s32 0, %v60
  %v62 = vsel %vm52, %v61, %v60
  %vm63 = vcmp.lt.s32.totalorder %v48, 0
  %v64 = vsub.s32 0, %v48
  %v65 = vsel %vm63, %v64, %v48
  %v66 = vmul.u32.u64.compose %v65, 3817748708
  %v67 = vextract.low.u32 %v66
  %v68 = vextract.high.u32 %v66
  %v69 = vshrl.u32 %v68, 4
  %v70 = vmul.u32 %v69, 18
  %v71 = vsub.s32 %v65, %v70
  %v72 = vsub.s32 0, %v71
  %v73 = vsel %vm63, %v72, %v71
  %vm74 = vcmp.lt.s32.totalorder %v49, 0
  %v75 = vsub.s32 0, %v49
  %v76 = vsel %vm74, %v75, %v49
  %v77 = vmul.u32.u64.compose %v76, 3817748708
  %v78 = vextract.low.u32 %v77
  %v79 = vextract.high.u32 %v77
  %v80 = vshrl.u32 %v79, 4
  %v81 = vmul.u32 %v80, 18
  %v82 = vsub.s32 %v76, %v81
  %v83 = vsub.s32 0, %v82
  %v84 = vsel %vm74, %v83, %v82
  %vm85 = vcmp.lt.s32.totalorder %v50, 0
  %v86 = vsub.s32 0, %v50
  %v87 = vsel %vm85, %v86, %v50
  %v88 = vmul.u32.u64.compose %v87, 3817748708
  %v89 = vextract.low.u32 %v88
  %v90 = vextract.high.u32 %v88
  %v91 = vshrl.u32 %v90, 4
  %v92 = vmul.u32 %v91, 18
  %v93 = vsub.s32 %v87, %v92
  %v94 = vsub.s32 0, %v93
  %v95 = vsel %vm85, %v94, %v93
  %vm96 = vcmp.lt.s32.totalorder %v51, 0
  %v97 = vsub.s32 0, %v51
  %v98 = vsel %vm96, %v97, %v51
  %v99 = vmul.u32.u64.compose %v98, 3817748708
  %v100 = vextract.low.u32 %v99
  %v101 = vextract.high.u32 %v99
  %v102 = vshrl.u32 %v101, 4
  %v103 = vmul.u32 %v102, 18
  %v104 = vsub.s32 %v98, %v103
  %v105 = vsub.s32 0, %v104
  %v106 = vsel %vm96, %v105, %v104
  %vm107 = vcmp.ne.s32.totalorder %v62, 0
  %vm108 = vcmp.ne.s32.totalorder %v73, 0
  %vm109 = vcmp.ne.s32.totalorder %v84, 0
  %vm110 = vcmp.ne.s32.totalorder %v95, 0
  %vm111 = vcmp.ne.s32.totalorder %v106, 0
  %vm112 = vcmp.lt.s32.totalorder %v62, 0
  %vm113 = vcmp.lt.s32.totalorder %v73, 0
  %vm114 = vcmp.lt.s32.totalorder %v84, 0
  %vm115 = vcmp.lt.s32.totalorder %v95, 0
  %vm116 = vcmp.lt.s32.totalorder %v106, 0
  %vm117 = vmand %vm112, %vm107
  %vm118 = vmand %vm113, %vm108
  %vm119 = vmand %vm114, %vm109
  %vm120 = vmand %vm115, %vm110
  %vm121 = vmand %vm116, %vm111
  %v122 = vadd.s32 %v62, 18
  %v123 = vadd.s32 %v73, 18
  %v124 = vadd.s32 %v84, 18
  %v125 = vadd.s32 %v95, 18
  %v126 = vadd.s32 %v106, 18
  %v127 = vsel %vm117, %v122, %v62
  %v128 = vsel %vm118, %v123, %v73
  %v129 = vsel %vm119, %v124, %v84
  %v130 = vsel %vm120, %v125, %v95
  %v131 = vsel %vm121, %v126, %v106
  %vm132 = vcmp.lt.s32.totalorder %v127, 16
  %vm133 = vcmp.lt.s32.totalorder %v128, 16
  %vm134 = vcmp.lt.s32.totalorder %v129, 16
  %vm135 = vcmp.lt.s32.totalorder %v130, 16
  %vm136 = vcmp.lt.s32.totalorder %v131, 16
  %137 = vst [vmem:[#allocation2] sm:$0xff] 0.0
  %138 = vst [vmem:[#allocation2 + $0x8] sm:$0xff] 0.0
  %139 = vst [vmem:[#allocation2 + $0x10] sm:$0xff] 0.0
  %140 = vst [vmem:[#allocation2 + $0x18] sm:$0xff] 0.0
  %141 = vst [vmem:[#allocation2 + $0x20] sm:$0xf] 0.0
  %v142 = vld [vmem:[%s0] sm:$0xff]
  %v143 = vld [vmem:[%s0 + $0x8] sm:$0xff]
  %144 = vst [vmem:[#allocation2 + $0x1] sm:$0xff] %v142
  %145 = vst [vmem:[#allocation2 + $0x9] sm:$0xff] %v143
  %s146 = scalar_lea.vmem %s0, 16
  %v147 = vld [vmem:[%s146] sm:$0xff]
  %v148 = vld [vmem:[%s146 + $0x8] sm:$0xff]
  %149 = vst [vmem:[#allocation2 + $0x13] sm:$0xff] %v147
  %150 = vst [vmem:[#allocation2 + $0x1b] sm:$0xff] %v148
  %v151 = vld [vmem:[#allocation2] sm:$0xff]
  %v152 = vld [vmem:[#allocation2 + $0x8] sm:$0xff]
  %v153 = vld [vmem:[#allocation2 + $0x10] sm:$0xff]
  %v154 = vld [vmem:[#allocation2 + $0x18] sm:$0xff]
  %v155 = vld [vmem:[#allocation2 + $0x20] sm:$0x3]
  %v156 = vld [vmem:[#allocation2 + $0x1] sm:$0xff]
  %v157 = vld [vmem:[#allocation2 + $0x9] sm:$0xff]
  %v158 = vld [vmem:[#allocation2 + $0x11] sm:$0xff]
  %v159 = vld [vmem:[#allocation2 + $0x19] sm:$0xff]
  %v160 = vld [vmem:[#allocation2 + $0x21] sm:$0x3]
  %v161 = vld [vmem:[#allocation2 + $0x2] sm:$0xff]
  %v162 = vld [vmem:[#allocation2 + $0xa] sm:$0xff]
  %v163 = vld [vmem:[#allocation2 + $0x12] sm:$0xff]
  %v164 = vld [vmem:[#allocation2 + $0x1a] sm:$0xff]
  %v165 = vld [vmem:[#allocation2 + $0x22] sm:$0x3]
  %v166 = vpack.c.bf16 %v152, %v151
  %v167 = vpack.c.bf16 %v157, %v156
  %v168 = vpack.c.bf16 %v162, %v161
  %v169 = vpack.c.bf16 %v154, %v153
  %v170 = vpack.c.bf16 %v159, %v158
  %v171 = vpack.c.bf16 %v164, %v163
  %v172 = vpack.c.bf16 %v155, %v155
  %v173 = vpack.c.bf16 %v160, %v160
  %v174 = vpack.c.bf16 %v165, %v165
  %v175 = vld [vmem:[%s1] sm:$0xf]
  %v176 = vld [vmem:[%s1 + $0x4] sm:$0xf]
  %v177 = vld [vmem:[%s1 + $0x8] sm:$0xf]
  %v178 = vld [vmem:[%s1 + $0xc] sm:$0xf]
  %v179 = vld [vmem:[%s1 + $0x10] sm:$0xf]
  %v180 = vld [vmem:[%s1 + $0x14] sm:$0xf]
  %v181 = vld [vmem:[%s1 + $0x18] sm:$0xf]
  %v182 = vld [vmem:[%s1 + $0x1c] sm:$0xf]
  %v183 = vld [vmem:[%s1 + $0x20] sm:$0xf]
  %v184 = vld [vmem:[%s1 + $0x24] sm:$0xf]
  %v185 = vld [vmem:[%s1 + $0x28] sm:$0xf]
  %v186 = vld [vmem:[%s1 + $0x2c] sm:$0xf]
  %v187 = vld [vmem:[%s1 + $0x30] sm:$0xf]
  %v188 = vld [vmem:[%s1 + $0x34] sm:$0xf]
  %v189 = vld [vmem:[%s1 + $0x38] sm:$0xf]
  %v190 = vld [vmem:[%s1 + $0x3c] sm:$0xf]
  %v191 = vld [vmem:[%s1 + $0x40] sm:$0xf]
  %v192 = vld [vmem:[%s1 + $0x44] sm:$0xf]
  %v193 = vld [vmem:[%s1 + $0x48] sm:$0xf]
  %v194 = vld [vmem:[%s1 + $0x4c] sm:$0xf]
  %v195 = vld [vmem:[%s1 + $0x50] sm:$0xf]
  %v196 = vld [vmem:[%s1 + $0x54] sm:$0xf]
  %v197 = vld [vmem:[%s1 + $0x58] sm:$0xf]
  %v198 = vld [vmem:[%s1 + $0x5c] sm:$0xf]
  %v199 = vld [vmem:[%s1 + $0x60] sm:$0xf]
  %v200 = vld [vmem:[%s1 + $0x64] sm:$0xf]
  %v201 = vld [vmem:[%s1 + $0x68] sm:$0xf]
  %v202 = vld [vmem:[%s1 + $0x6c] sm:$0xf]
  %v203 = vld [vmem:[%s1 + $0x70] sm:$0xf]
  %v204 = vld [vmem:[%s1 + $0x74] sm:$0xf]
  %v205 = vld [vmem:[%s1 + $0x78] sm:$0xf]
  %v206 = vld [vmem:[%s1 + $0x7c] sm:$0xf]
  %v207 = vld [vmem:[%s1 + $0x80] sm:$0xf]
  %v208 = vld [vmem:[%s1 + $0x84] sm:$0xf]
  %v209 = vld [vmem:[%s1 + $0x88] sm:$0xf]
  %v210 = vld [vmem:[%s1 + $0x8c] sm:$0xf]
  %v211 = vld [vmem:[%s1 + $0x90] sm:$0xf]
  %v212 = vld [vmem:[%s1 + $0x94] sm:$0xf]
  %v213 = vld [vmem:[%s1 + $0x98] sm:$0xf]
  %v214 = vld [vmem:[%s1 + $0x9c] sm:$0xf]
  %v215 = vld [vmem:[%s1 + $0xa0] sm:$0xf]
  %v216 = vld [vmem:[%s1 + $0xa4] sm:$0xf]
  %v217 = vld [vmem:[%s1 + $0xa8] sm:$0xf]
  %v218 = vld [vmem:[%s1 + $0xac] sm:$0xf]
  %v219 = vld [vmem:[%s1 + $0xb0] sm:$0xf]
  %v220 = vld [vmem:[%s1 + $0xb4] sm:$0xf]
  %v221 = vld [vmem:[%s1 + $0xb8] sm:$0xf]
  %v222 = vld [vmem:[%s1 + $0xbc] sm:$0xf]
  %v271 = vunpack.c.l.b16 %v175
  %v272 = vunpack.c.l.b16 %v176
  %v273 = vunpack.c.l.b16 %v177
  %v274 = vunpack.c.l.b16 %v178
  %v275 = vunpack.c.l.b16 %v179
  %v276 = vunpack.c.l.b16 %v180
  %v277 = vunpack.c.l.b16 %v181
  %v278 = vunpack.c.l.b16 %v182
  %v279 = vunpack.c.l.b16 %v183
  %v280 = vunpack.c.l.b16 %v184
  %v281 = vunpack.c.l.b16 %v185
  %v282 = vunpack.c.l.b16 %v186
  %v283 = vunpack.c.l.b16 %v187
  %v284 = vunpack.c.l.b16 %v188
  %v285 = vunpack.c.l.b16 %v189
  %v286 = vunpack.c.l.b16 %v190
  %v287 = vunpack.c.l.b16 %v191
  %v288 = vunpack.c.l.b16 %v192
  %v289 = vunpack.c.l.b16 %v193
  %v290 = vunpack.c.l.b16 %v194
  %v291 = vunpack.c.l.b16 %v195
  %v292 = vunpack.c.l.b16 %v196
  %v293 = vunpack.c.l.b16 %v197
  %v294 = vunpack.c.l.b16 %v198
  %v295 = vunpack.c.l.b16 %v199
  %v296 = vunpack.c.l.b16 %v200
  %v297 = vunpack.c.l.b16 %v201
  %v298 = vunpack.c.l.b16 %v202
  %v299 = vunpack.c.l.b16 %v203
  %v300 = vunpack.c.l.b16 %v204
  %v301 = vunpack.c.l.b16 %v205
  %v302 = vunpack.c.l.b16 %v206
  %v303 = vunpack.c.l.b16 %v207
  %v304 = vunpack.c.l.b16 %v208
  %v305 = vunpack.c.l.b16 %v209
  %v306 = vunpack.c.l.b16 %v210
  %v307 = vunpack.c.l.b16 %v211
  %v308 = vunpack.c.l.b16 %v212
  %v309 = vunpack.c.l.b16 %v213
  %v310 = vunpack.c.l.b16 %v214
  %v311 = vunpack.c.l.b16 %v215
  %v312 = vunpack.c.l.b16 %v216
  %v313 = vunpack.c.l.b16 %v217
  %v314 = vunpack.c.l.b16 %v218
  %v315 = vunpack.c.l.b16 %v219
  %v316 = vunpack.c.l.b16 %v220
  %v317 = vunpack.c.l.b16 %v221
  %v318 = vunpack.c.l.b16 %v222
  %v319 = vpack.c.b16 %v272, %v271
  %v320 = vpack.c.b16 %v274, %v273
  %v321 = vpack.c.b16 %v276, %v275
  %v322 = vpack.c.b16 %v278, %v277
  %v323 = vpack.c.b16 %v280, %v279
  %v324 = vpack.c.b16 %v282, %v281
  %v325 = vpack.c.b16 %v284, %v283
  %v326 = vpack.c.b16 %v286, %v285
  %v327 = vpack.c.b16 %v288, %v287
  %v328 = vpack.c.b16 %v290, %v289
  %v329 = vpack.c.b16 %v292, %v291
  %v330 = vpack.c.b16 %v294, %v293
  %v331 = vpack.c.b16 %v296, %v295
  %v332 = vpack.c.b16 %v298, %v297
  %v333 = vpack.c.b16 %v300, %v299
  %v334 = vpack.c.b16 %v302, %v301
  %v335 = vpack.c.b16 %v304, %v303
  %v336 = vpack.c.b16 %v306, %v305
  %v337 = vpack.c.b16 %v308, %v307
  %v338 = vpack.c.b16 %v310, %v309
  %v339 = vpack.c.b16 %v312, %v311
  %v340 = vpack.c.b16 %v314, %v313
  %v341 = vpack.c.b16 %v316, %v315
  %v342 = vpack.c.b16 %v318, %v317
  %367 = vmatprep.subr.bf16.mxu0 0
  %368 = vmatpush1.bf16.msra.mxu0 %v319
  %369 = vmatprep.subr.bf16.mxu0 0
  %370 = vmatpush1.bf16.msra.mxu0 %v320
  %371 = vmatprep.subr.bf16.mxu0 0
  %372 = vmatpush1.bf16.msra.mxu0 %v321
  %373 = vmatprep.subr.bf16.mxu0 0
  %374 = vmatpush1.bf16.msra.mxu0 %v322
  %375 = vmatprep.subr.bf16.mxu0 0
  %376 = vmatpush1.bf16.msra.mxu0 %v323
  %377 = vmatprep.subr.bf16.mxu0 0
  %378 = vmatpush1.bf16.msra.mxu0 %v324
  %379 = vmatprep.subr.bf16.mxu0 0
  %380 = vmatpush1.bf16.msra.mxu0 %v325
  %381 = vmatprep.subr.bf16.mxu0 0
  %382 = vmatpush1.bf16.msra.mxu0 %v326
  %383 = vmatprep.subr.bf16.mxu0 0
  %384 = vmatpush1.bf16.msra.mxu0 %v327
  %385 = vmatprep.subr.bf16.mxu0 0
  %386 = vmatpush1.bf16.msra.mxu0 %v328
  %387 = vmatprep.subr.bf16.mxu0 0
  %388 = vmatpush1.bf16.msra.mxu0 %v329
  %389 = vmatprep.subr.bf16.mxu0 0
  %390 = vmatpush1.bf16.msra.mxu0 %v330
  %391 = vmatprep.subr.bf16.mxu0 0
  %392 = vmatpush1.bf16.msra.mxu0 %v331
  %393 = vmatprep.subr.bf16.mxu0 0
  %394 = vmatpush1.bf16.msra.mxu0 %v332
  %395 = vmatprep.subr.bf16.mxu0 0
  %396 = vmatpush1.bf16.msra.mxu0 %v333
  %397 = vmatprep.subr.bf16.mxu0 0
  %398 = vmatpush1.bf16.msra.mxu0 %v334
  %399 = vmatprep.mubr.bf16.mxu0 %v167
  %400 = vmatmul.mubr.bf16.gmra.mrb[0].mxu0 %v166
  %v401 = vpop.f32.mrb[0].mxu0
  %v402 = vadd.f32 0.0, %v401
  %v403 = vpop.f32.mrb[0].mxu0
  %v404 = vpop.f32.mrb[0].mxu0
  %v405 = vadd.f32 0.0, %v404
  %v406 = vpop.f32.mrb[0].mxu0
  %407 = vmatprep.mubr.bf16.mxu0 %v170
  %408 = vmatmul.mubr.bf16.gmra.mrb[0].mxu0 %v169
  %v409 = vpop.f32.mrb[0].mxu0
  %v410 = vadd.f32 0.0, %v409
  %v411 = vpop.f32.mrb[0].mxu0
  %v412 = vpop.f32.mrb[0].mxu0
  %v413 = vadd.f32 0.0, %v412
  %v414 = vpop.f32.mrb[0].mxu0
  %415 = vmatprep.mubr.bf16.mxu0 %v173
  %416 = vmatmul.mubr.bf16.gmra.mrb[0].mxu0 %v172
  %v417 = vpop.f32.mrb[0].mxu0
  %v418 = vadd.f32 0.0, %v417
  %v419 = vpop.f32.mrb[0].mxu0
  %v420 = vpop.f32.mrb[0].mxu0
  %v421 = vpop.f32.mrb[0].mxu0
  %422 = vdwg.mxu0
  %423 = vmatprep.subr.bf16.mxu0 0
  %424 = vmatpush1.bf16.msra.mxu0 %v335
  %425 = vmatprep.subr.bf16.mxu0 0
  %426 = vmatpush1.bf16.msra.mxu0 %v336
  %427 = vmatprep.subr.bf16.mxu0 0
  %428 = vmatpush1.bf16.msra.mxu0 %v337
  %429 = vmatprep.subr.bf16.mxu0 0
  %430 = vmatpush1.bf16.msra.mxu0 %v338
  %431 = vmatprep.subr.bf16.mxu0 0
  %432 = vmatpush1.bf16.msra.mxu0 %v339
  %433 = vmatprep.subr.bf16.mxu0 0
  %434 = vmatpush1.bf16.msra.mxu0 %v340
  %435 = vmatprep.subr.bf16.mxu0 0
  %436 = vmatpush1.bf16.msra.mxu0 %v341
  %437 = vmatprep.subr.bf16.mxu0 0
  %438 = vmatpush1.bf16.msra.mxu0 %v342
  %439 = vmatprep.subr.bf16.mxu0 0
  %440 = vmatpush1.bf16.msra.mxu0 0
  %441 = vmatprep.subr.bf16.mxu0 0
  %442 = vmatpush1.bf16.msra.mxu0 0
  %443 = vmatprep.subr.bf16.mxu0 0
  %444 = vmatpush1.bf16.msra.mxu0 0
  %445 = vmatprep.subr.bf16.mxu0 0
  %446 = vmatpush1.bf16.msra.mxu0 0
  %447 = vmatprep.subr.bf16.mxu0 0
  %448 = vmatpush1.bf16.msra.mxu0 0
  %449 = vmatprep.subr.bf16.mxu0 0
  %450 = vmatpush1.bf16.msra.mxu0 0
  %451 = vmatprep.subr.bf16.mxu0 0
  %452 = vmatpush1.bf16.msra.mxu0 0
  %453 = vmatprep.subr.bf16.mxu0 0
  %454 = vmatpush1.bf16.msra.mxu0 0
  %455 = vmatprep.mubr.bf16.mxu0 0
  %456 = vmatmul.mubr.bf16.gmra.mrb[0].mxu0 %v168
  %v457 = vpop.f32.mrb[0].mxu0
  %v458 = vadd.f32 %v402, %v457
  %v459 = vpop.f32.mrb[0].mxu0
  %v460 = vpop.f32.mrb[0].mxu0
  %v461 = vadd.f32 %v405, %v460
  %v462 = vpop.f32.mrb[0].mxu0
  %463 = vmatprep.mubr.bf16.mxu0 0
  %464 = vmatmul.mubr.bf16.gmra.mrb[0].mxu0 %v171
  %v465 = vpop.f32.mrb[0].mxu0
  %v466 = vadd.f32 %v410, %v465
  %v467 = vpop.f32.mrb[0].mxu0
  %v468 = vpop.f32.mrb[0].mxu0
  %v469 = vadd.f32 %v413, %v468
  %v470 = vpop.f32.mrb[0].mxu0
  %471 = vmatprep.mubr.bf16.mxu0 0
  %472 = vmatmul.mubr.bf16.gmra.mrb[0].mxu0 %v174
  %v473 = vpop.f32.mrb[0].mxu0
  %v474 = vadd.f32 %v418, %v473
  %v475 = vpop.f32.mrb[0].mxu0
  %v476 = vpop.f32.mrb[0].mxu0
  %v477 = vpop.f32.mrb[0].mxu0
  %478 = vdwg.mxu0
  %v479 = vld [vmem:[%s3] sm:$0x1]
  %v480 = vld [vmem:[%s4] sm:$0x1]
  %v481 = vsel %vm132, %v458, 0.0
  %v482 = vsel %vm133, %v461, 0.0
  %v483 = vsel %vm134, %v466, 0.0
  %v484 = vsel %vm135, %v469, 0.0
  %v485 = vsel %vm136, %v474, 0.0
  %v486 = vadd.f32 %v481, %v482
  %v487 = vadd.f32 %v486, %v483
  %v488 = vadd.f32 %v487, %v484
  %vm489 = vcmask 1041408
  %v490 = vsel %vm489, %v485, 0.0
  %v491 = vadd.f32 %v488, %v490
  %v492 = vrot.slane %v491, 4
  %v493 = vadd.f32 %v491, %v492
  %v494 = vrot.slane %v493, 2
  %v495 = vadd.f32 %v493, %v494
  %v496 = vrot.slane %v495, 1
  %v497 = vadd.f32 %v495, %v496
  %498 = vmatprep.subr.mxu0 0.0
  %499 = vmatpush1.msra.mxu0 %v30
  %500 = vmatprep.subr.mxu0 0.0
  %501 = vmatpush1.msra.mxu0 %v31
  %502 = vmatprep.subr.mxu0 0.0
  %503 = vmatpush1.msra.mxu0 %v32
  %504 = vmatprep.subr.mxu0 0.0
  %505 = vmatpush1.msra.mxu0 %v33
  %506 = vmatprep.subr.mxu0 0.0
  %507 = vmatpush1.msra.mxu0 %v34
  %508 = vmatprep.subr.mxu0 0.0
  %509 = vmatpush1.msra.mxu0 %v35
  %510 = vmatprep.subr.mxu0 0.0
  %511 = vmatpush1.msra.mxu0 %v36
  %512 = vmatprep.subr.mxu0 0.0
  %513 = vmatpush1.msra.mxu0 %v37
  %514 = vmatprep.subr.mxu0 0.0
  %515 = vmatpush1.msra.mxu0 %v38
  %516 = vmatprep.subr.mxu0 0.0
  %517 = vmatpush1.msra.mxu0 %v39
  %518 = vmatprep.subr.mxu0 0.0
  %519 = vmatpush1.msra.mxu0 %v40
  %520 = vmatprep.subr.mxu0 0.0
  %521 = vmatpush1.msra.mxu0 %v41
  %522 = vmatprep.subr.mxu0 0.0
  %523 = vmatpush1.msra.mxu0 %v42
  %524 = vmatprep.subr.mxu0 0.0
  %525 = vmatpush1.msra.mxu0 %v43
  %526 = vmatprep.subr.mxu0 0.0
  %527 = vmatpush1.msra.mxu0 %v44
  %528 = vmatprep.subr.mxu0 0.0
  %529 = vmatpush1.msra.mxu0 %v45
  %530 = vmatprep.subr.mxu0 0.0
  %531 = vmatpush1.msra.mxu0 0.0
  %532 = vmatprep.subr.mxu0 0.0
  %533 = vmatpush1.msra.mxu0 0.0
  %534 = vmatprep.subr.mxu0 0.0
  %535 = vmatpush1.msra.mxu0 0.0
  %536 = vmatprep.subr.mxu0 0.0
  %537 = vmatpush1.msra.mxu0 0.0
  %538 = vmatprep.subr.mxu0 0.0
  %539 = vmatpush1.msra.mxu0 0.0
  %540 = vmatprep.subr.mxu0 0.0
  %541 = vmatpush1.msra.mxu0 0.0
  %542 = vmatprep.subr.mxu0 0.0
  %543 = vmatpush1.msra.mxu0 0.0
  %544 = vmatprep.subr.mxu0 0.0
  %545 = vmatpush1.msra.mxu0 0.0
  %546 = vmatprep.subr.mxu0 0.0
  %547 = vmatpush1.msra.mxu0 0.0
  %548 = vmatprep.subr.mxu0 0.0
  %549 = vmatpush1.msra.mxu0 0.0
  %550 = vmatprep.subr.mxu0 0.0
  %551 = vmatpush1.msra.mxu0 0.0
  %552 = vmatprep.subr.mxu0 0.0
  %553 = vmatpush1.msra.mxu0 0.0
  %554 = vmatprep.subr.mxu0 0.0
  %555 = vmatpush1.msra.mxu0 0.0
  %556 = vmatprep.subr.mxu0 0.0
  %557 = vmatpush1.msra.mxu0 0.0
  %558 = vmatprep.subr.mxu0 0.0
  %559 = vmatpush1.msra.mxu0 0.0
  %560 = vmatprep.subr.mxu0 0.0
  %561 = vmatpush1.msra.mxu0 0.0
  %562 = vmatprep.mubr.f32.mxu0 0.0
  %563 = vmatmul.mubr.f32.gmra.mrb[0].mxu0 %v497
  %v564 = vpop.f32.mrb[0].mxu0
  %v565 = vadd.f32 0.0, %v564
  %v566 = vpop.f32.mrb[0].mxu0
  %567 = vdwg.mxu0
  %v568 = vmul.f32 %v565, 0.001953125
  %v569 = vlaneseq
  %v570 = vshrl.u32 %v569, 7
  %v571 = vsub.s32 0, %v570
  %v572 = vrot.slane %v568, %v571
  %v573 = vsub.f32 %v458, %v572
  %v574 = vsub.f32 %v461, %v572
  %v575 = vsub.f32 %v466, %v572
  %v576 = vsub.f32 %v469, %v572
  %v577 = vsub.f32 %v474, %v572
  %v578 = vsel %vm132, %v573, 0.0
  %v579 = vsel %vm133, %v574, 0.0
  %v580 = vsel %vm134, %v575, 0.0
  %v581 = vsel %vm135, %v576, 0.0
  %v582 = vsel %vm136, %v577, 0.0
  %v583 = vmul.f32 %v578, %v578
  %v584 = vmul.f32 %v579, %v579
  %v585 = vmul.f32 %v580, %v580
  %v586 = vmul.f32 %v581, %v581
  %v587 = vmul.f32 %v582, %v582
  %v588 = vadd.f32 %v583, %v584
  %v589 = vadd.f32 %v588, %v585
  %v590 = vadd.f32 %v589, %v586
  %v591 = vsel %vm489, %v587, 0.0
  %v592 = vadd.f32 %v590, %v591
  %v593 = vrot.slane %v592, 4
  %v594 = vadd.f32 %v592, %v593
  %v595 = vrot.slane %v594, 2
  %v596 = vadd.f32 %v594, %v595
  %v597 = vrot.slane %v596, 1
  %v598 = vadd.f32 %v596, %v597
  %599 = vmatprep.subr.mxu0 0.0
  %600 = vmatpush1.msra.mxu0 %v30
  %601 = vmatprep.subr.mxu0 0.0
  %602 = vmatpush1.msra.mxu0 %v31
  %603 = vmatprep.subr.mxu0 0.0
  %604 = vmatpush1.msra.mxu0 %v32
  %605 = vmatprep.subr.mxu0 0.0
  %606 = vmatpush1.msra.mxu0 %v33
  %607 = vmatprep.subr.mxu0 0.0
  %608 = vmatpush1.msra.mxu0 %v34
  %609 = vmatprep.subr.mxu0 0.0
  %610 = vmatpush1.msra.mxu0 %v35
  %611 = vmatprep.subr.mxu0 0.0
  %612 = vmatpush1.msra.mxu0 %v36
  %613 = vmatprep.subr.mxu0 0.0
  %614 = vmatpush1.msra.mxu0 %v37
  %615 = vmatprep.subr.mxu0 0.0
  %616 = vmatpush1.msra.mxu0 %v38
  %617 = vmatprep.subr.mxu0 0.0
  %618 = vmatpush1.msra.mxu0 %v39
  %619 = vmatprep.subr.mxu0 0.0
  %620 = vmatpush1.msra.mxu0 %v40
  %621 = vmatprep.subr.mxu0 0.0
  %622 = vmatpush1.msra.mxu0 %v41
  %623 = vmatprep.subr.mxu0 0.0
  %624 = vmatpush1.msra.mxu0 %v42
  %625 = vmatprep.subr.mxu0 0.0
  %626 = vmatpush1.msra.mxu0 %v43
  %627 = vmatprep.subr.mxu0 0.0
  %628 = vmatpush1.msra.mxu0 %v44
  %629 = vmatprep.subr.mxu0 0.0
  %630 = vmatpush1.msra.mxu0 %v45
  %631 = vmatprep.subr.mxu0 0.0
  %632 = vmatpush1.msra.mxu0 0.0
  %633 = vmatprep.subr.mxu0 0.0
  %634 = vmatpush1.msra.mxu0 0.0
  %635 = vmatprep.subr.mxu0 0.0
  %636 = vmatpush1.msra.mxu0 0.0
  %637 = vmatprep.subr.mxu0 0.0
  %638 = vmatpush1.msra.mxu0 0.0
  %639 = vmatprep.subr.mxu0 0.0
  %640 = vmatpush1.msra.mxu0 0.0
  %641 = vmatprep.subr.mxu0 0.0
  %642 = vmatpush1.msra.mxu0 0.0
  %643 = vmatprep.subr.mxu0 0.0
  %644 = vmatpush1.msra.mxu0 0.0
  %645 = vmatprep.subr.mxu0 0.0
  %646 = vmatpush1.msra.mxu0 0.0
  %647 = vmatprep.subr.mxu0 0.0
  %648 = vmatpush1.msra.mxu0 0.0
  %649 = vmatprep.subr.mxu0 0.0
  %650 = vmatpush1.msra.mxu0 0.0
  %651 = vmatprep.subr.mxu0 0.0
  %652 = vmatpush1.msra.mxu0 0.0
  %653 = vmatprep.subr.mxu0 0.0
  %654 = vmatpush1.msra.mxu0 0.0
  %655 = vmatprep.subr.mxu0 0.0
  %656 = vmatpush1.msra.mxu0 0.0
  %657 = vmatprep.subr.mxu0 0.0
  %658 = vmatpush1.msra.mxu0 0.0
  %659 = vmatprep.subr.mxu0 0.0
  %660 = vmatpush1.msra.mxu0 0.0
  %661 = vmatprep.subr.mxu0 0.0
  %662 = vmatpush1.msra.mxu0 0.0
  %663 = vmatprep.mubr.f32.mxu0 0.0
  %664 = vmatmul.mubr.f32.gmra.mrb[0].mxu0 %v598
  %v665 = vpop.f32.mrb[0].mxu0
  %v666 = vadd.f32 0.0, %v665
  %v667 = vpop.f32.mrb[0].mxu0
  %668 = vdwg.mxu0
  %v669 = vmul.f32 %v666, 0.001953125
  %v670 = vadd.f32 %v669, 1e-05
  %v671 = vrsqrt.pop %v670
  %v672 = vmul.f32 %v671, %v479
  %v673 = vlaneseq
  %v674 = vshrl.u32 %v673, 7
  %v675 = vsub.s32 0, %v674
  %v676 = vrot.slane %v672, %v675
  %v677 = vmul.f32 %v458, %v676
  %v678 = vmul.f32 %v461, %v676
  %v679 = vmul.f32 %v466, %v676
  %v680 = vmul.f32 %v469, %v676
  %v681 = vmul.f32 %v474, %v676
  %v682 = vmul.f32 %v568, %v672
  %v683 = vsub.f32 %v480, %v682
  %v685 = vlaneseq
  %v686 = vshrl.u32 %v685, 7
  %v687 = vsub.s32 0, %v686
  %v688 = vrot.slane %v683, %v687
  %v690 = vadd.f32 %v677, %v688
  %v691 = vadd.f32 %v678, %v688
  %v692 = vadd.f32 %v679, %v688
  %v693 = vadd.f32 %v680, %v688
  %v694 = vadd.f32 %v681, %v688
  %v695 = vmax.f32 %v690, 0.0
  %v696 = vmax.f32 %v691, 0.0
  %v697 = vmax.f32 %v692, 0.0
  %v698 = vmax.f32 %v693, 0.0
  %v699 = vmax.f32 %v694, 0.0
  %700 = vst [vmem:[#allocation3] sm:$0xff] %v695
  %701 = vst [vmem:[#allocation3 + $0x8] sm:$0xff] %v696
  %702 = vst [vmem:[#allocation3 + $0x10] sm:$0xff] %v697
  %703 = vst [vmem:[#allocation3 + $0x18] sm:$0xff] %v698
  %704 = vst [vmem:[#allocation3 + $0x20] sm:$0x3] %v699
  %v705 = vld [vmem:[#allocation3] sm:$0xff]
  %v706 = vld [vmem:[#allocation3 + $0x8] sm:$0xff]
  %707 = vst [vmem:[#allocation2 + $0x1] sm:$0xff] %v705
  %708 = vst [vmem:[#allocation2 + $0x9] sm:$0xff] %v706
  %v709 = vld [vmem:[#allocation3 + $0x12] sm:$0xff]
  %v710 = vld [vmem:[#allocation3 + $0x1a] sm:$0xff]
  %711 = vst [vmem:[#allocation2 + $0x13] sm:$0xff] %v709
  %712 = vst [vmem:[#allocation2 + $0x1b] sm:$0xff] %v710
  %v713 = vld [vmem:[#allocation2] sm:$0xff]
  %v714 = vld [vmem:[#allocation2 + $0x8] sm:$0xff]
  %v715 = vld [vmem:[#allocation2 + $0x10] sm:$0xff]
  %v716 = vld [vmem:[#allocation2 + $0x18] sm:$0xff]
  %v717 = vld [vmem:[#allocation2 + $0x20] sm:$0x3]
  %v718 = vld [vmem:[#allocation2 + $0x1] sm:$0xff]
  %v719 = vld [vmem:[#allocation2 + $0x9] sm:$0xff]
  %v720 = vld [vmem:[#allocation2 + $0x11] sm:$0xff]
  %v721 = vld [vmem:[#allocation2 + $0x19] sm:$0xff]
  %v722 = vld [vmem:[#allocation2 + $0x21] sm:$0x3]
  %v723 = vld [vmem:[#allocation2 + $0x2] sm:$0xff]
  %v724 = vld [vmem:[#allocation2 + $0xa] sm:$0xff]
  %v725 = vld [vmem:[#allocation2 + $0x12] sm:$0xff]
  %v726 = vld [vmem:[#allocation2 + $0x1a] sm:$0xff]
  %v727 = vld [vmem:[#allocation2 + $0x22] sm:$0x3]
  %v728 = vpack.c.bf16 %v714, %v713
  %v729 = vpack.c.bf16 %v719, %v718
  %v730 = vpack.c.bf16 %v724, %v723
  %v731 = vpack.c.bf16 %v716, %v715
  %v732 = vpack.c.bf16 %v721, %v720
  %v733 = vpack.c.bf16 %v726, %v725
  %v734 = vpack.c.bf16 %v717, %v717
  %v735 = vpack.c.bf16 %v722, %v722
  %v736 = vpack.c.bf16 %v727, %v727
  %v737 = vld [vmem:[%s2] sm:$0xf]
  %v738 = vld [vmem:[%s2 + $0x4] sm:$0xf]
  %v739 = vld [vmem:[%s2 + $0x8] sm:$0xf]
  %v740 = vld [vmem:[%s2 + $0xc] sm:$0xf]
  %v741 = vld [vmem:[%s2 + $0x10] sm:$0xf]
  %v742 = vld [vmem:[%s2 + $0x14] sm:$0xf]
  %v743 = vld [vmem:[%s2 + $0x18] sm:$0xf]
  %v744 = vld [vmem:[%s2 + $0x1c] sm:$0xf]
  %v745 = vld [vmem:[%s2 + $0x20] sm:$0xf]
  %v746 = vld [vmem:[%s2 + $0x24] sm:$0xf]
  %v747 = vld [vmem:[%s2 + $0x28] sm:$0xf]
  %v748 = vld [vmem:[%s2 + $0x2c] sm:$0xf]
  %v749 = vld [vmem:[%s2 + $0x30] sm:$0xf]
  %v750 = vld [vmem:[%s2 + $0x34] sm:$0xf]
  %v751 = vld [vmem:[%s2 + $0x38] sm:$0xf]
  %v752 = vld [vmem:[%s2 + $0x3c] sm:$0xf]
  %v753 = vld [vmem:[%s2 + $0x40] sm:$0xf]
  %v754 = vld [vmem:[%s2 + $0x44] sm:$0xf]
  %v755 = vld [vmem:[%s2 + $0x48] sm:$0xf]
  %v756 = vld [vmem:[%s2 + $0x4c] sm:$0xf]
  %v757 = vld [vmem:[%s2 + $0x50] sm:$0xf]
  %v758 = vld [vmem:[%s2 + $0x54] sm:$0xf]
  %v759 = vld [vmem:[%s2 + $0x58] sm:$0xf]
  %v760 = vld [vmem:[%s2 + $0x5c] sm:$0xf]
  %v761 = vld [vmem:[%s2 + $0x60] sm:$0xf]
  %v762 = vld [vmem:[%s2 + $0x64] sm:$0xf]
  %v763 = vld [vmem:[%s2 + $0x68] sm:$0xf]
  %v764 = vld [vmem:[%s2 + $0x6c] sm:$0xf]
  %v765 = vld [vmem:[%s2 + $0x70] sm:$0xf]
  %v766 = vld [vmem:[%s2 + $0x74] sm:$0xf]
  %v767 = vld [vmem:[%s2 + $0x78] sm:$0xf]
  %v768 = vld [vmem:[%s2 + $0x7c] sm:$0xf]
  %v769 = vld [vmem:[%s2 + $0x80] sm:$0xf]
  %v770 = vld [vmem:[%s2 + $0x84] sm:$0xf]
  %v771 = vld [vmem:[%s2 + $0x88] sm:$0xf]
  %v772 = vld [vmem:[%s2 + $0x8c] sm:$0xf]
  %v773 = vld [vmem:[%s2 + $0x90] sm:$0xf]
  %v774 = vld [vmem:[%s2 + $0x94] sm:$0xf]
  %v775 = vld [vmem:[%s2 + $0x98] sm:$0xf]
  %v776 = vld [vmem:[%s2 + $0x9c] sm:$0xf]
  %v777 = vld [vmem:[%s2 + $0xa0] sm:$0xf]
  %v778 = vld [vmem:[%s2 + $0xa4] sm:$0xf]
  %v779 = vld [vmem:[%s2 + $0xa8] sm:$0xf]
  %v780 = vld [vmem:[%s2 + $0xac] sm:$0xf]
  %v781 = vld [vmem:[%s2 + $0xb0] sm:$0xf]
  %v782 = vld [vmem:[%s2 + $0xb4] sm:$0xf]
  %v783 = vld [vmem:[%s2 + $0xb8] sm:$0xf]
  %v784 = vld [vmem:[%s2 + $0xbc] sm:$0xf]
  %v833 = vunpack.c.l.b16 %v737
  %v834 = vunpack.c.l.b16 %v738
  %v835 = vunpack.c.l.b16 %v739
  %v836 = vunpack.c.l.b16 %v740
  %v837 = vunpack.c.l.b16 %v741
  %v838 = vunpack.c.l.b16 %v742
  %v839 = vunpack.c.l.b16 %v743
  %v840 = vunpack.c.l.b16 %v744
  %v841 = vunpack.c.l.b16 %v745
  %v842 = vunpack.c.l.b16 %v746
  %v843 = vunpack.c.l.b16 %v747
  %v844 = vunpack.c.l.b16 %v748
  %v845 = vunpack.c.l.b16 %v749
  %v846 = vunpack.c.l.b16 %v750
  %v847 = vunpack.c.l.b16 %v751
  %v848 = vunpack.c.l.b16 %v752
  %v849 = vunpack.c.l.b16 %v753
  %v850 = vunpack.c.l.b16 %v754
  %v851 = vunpack.c.l.b16 %v755
  %v852 = vunpack.c.l.b16 %v756
  %v853 = vunpack.c.l.b16 %v757
  %v854 = vunpack.c.l.b16 %v758
  %v855 = vunpack.c.l.b16 %v759
  %v856 = vunpack.c.l.b16 %v760
  %v857 = vunpack.c.l.b16 %v761
  %v858 = vunpack.c.l.b16 %v762
  %v859 = vunpack.c.l.b16 %v763
  %v860 = vunpack.c.l.b16 %v764
  %v861 = vunpack.c.l.b16 %v765
  %v862 = vunpack.c.l.b16 %v766
  %v863 = vunpack.c.l.b16 %v767
  %v864 = vunpack.c.l.b16 %v768
  %v865 = vunpack.c.l.b16 %v769
  %v866 = vunpack.c.l.b16 %v770
  %v867 = vunpack.c.l.b16 %v771
  %v868 = vunpack.c.l.b16 %v772
  %v869 = vunpack.c.l.b16 %v773
  %v870 = vunpack.c.l.b16 %v774
  %v871 = vunpack.c.l.b16 %v775
  %v872 = vunpack.c.l.b16 %v776
  %v873 = vunpack.c.l.b16 %v777
  %v874 = vunpack.c.l.b16 %v778
  %v875 = vunpack.c.l.b16 %v779
  %v876 = vunpack.c.l.b16 %v780
  %v877 = vunpack.c.l.b16 %v781
  %v878 = vunpack.c.l.b16 %v782
  %v879 = vunpack.c.l.b16 %v783
  %v880 = vunpack.c.l.b16 %v784
  %v881 = vpack.c.b16 %v834, %v833
  %v882 = vpack.c.b16 %v836, %v835
  %v883 = vpack.c.b16 %v838, %v837
  %v884 = vpack.c.b16 %v840, %v839
  %v885 = vpack.c.b16 %v842, %v841
  %v886 = vpack.c.b16 %v844, %v843
  %v887 = vpack.c.b16 %v846, %v845
  %v888 = vpack.c.b16 %v848, %v847
  %v889 = vpack.c.b16 %v850, %v849
  %v890 = vpack.c.b16 %v852, %v851
  %v891 = vpack.c.b16 %v854, %v853
  %v892 = vpack.c.b16 %v856, %v855
  %v893 = vpack.c.b16 %v858, %v857
  %v894 = vpack.c.b16 %v860, %v859
  %v895 = vpack.c.b16 %v862, %v861
  %v896 = vpack.c.b16 %v864, %v863
  %v897 = vpack.c.b16 %v866, %v865
  %v898 = vpack.c.b16 %v868, %v867
  %v899 = vpack.c.b16 %v870, %v869
  %v900 = vpack.c.b16 %v872, %v871
  %v901 = vpack.c.b16 %v874, %v873
  %v902 = vpack.c.b16 %v876, %v875
  %v903 = vpack.c.b16 %v878, %v877
  %v904 = vpack.c.b16 %v880, %v879
  %929 = vmatprep.subr.bf16.mxu0 0
  %930 = vmatpush1.bf16.msra.mxu0 %v881
  %931 = vmatprep.subr.bf16.mxu0 0
  %932 = vmatpush1.bf16.msra.mxu0 %v882
  %933 = vmatprep.subr.bf16.mxu0 0
  %934 = vmatpush1.bf16.msra.mxu0 %v883
  %935 = vmatprep.subr.bf16.mxu0 0
  %936 = vmatpush1.bf16.msra.mxu0 %v884
  %937 = vmatprep.subr.bf16.mxu0 0
  %938 = vmatpush1.bf16.msra.mxu0 %v885
  %939 = vmatprep.subr.bf16.mxu0 0
  %940 = vmatpush1.bf16.msra.mxu0 %v886
  %941 = vmatprep.subr.bf16.mxu0 0
  %942 = vmatpush1.bf16.msra.mxu0 %v887
  %943 = vmatprep.subr.bf16.mxu0 0
  %944 = vmatpush1.bf16.msra.mxu0 %v888
  %945 = vmatprep.subr.bf16.mxu0 0
  %946 = vmatpush1.bf16.msra.mxu0 %v889
  %947 = vmatprep.subr.bf16.mxu0 0
  %948 = vmatpush1.bf16.msra.mxu0 %v890
  %949 = vmatprep.subr.bf16.mxu0 0
  %950 = vmatpush1.bf16.msra.mxu0 %v891
  %951 = vmatprep.subr.bf16.mxu0 0
  %952 = vmatpush1.bf16.msra.mxu0 %v892
  %953 = vmatprep.subr.bf16.mxu0 0
  %954 = vmatpush1.bf16.msra.mxu0 %v893
  %955 = vmatprep.subr.bf16.mxu0 0
  %956 = vmatpush1.bf16.msra.mxu0 %v894
  %957 = vmatprep.subr.bf16.mxu0 0
  %958 = vmatpush1.bf16.msra.mxu0 %v895
  %959 = vmatprep.subr.bf16.mxu0 0
  %960 = vmatpush1.bf16.msra.mxu0 %v896
  %961 = vmatprep.mubr.bf16.mxu0 %v729
  %962 = vmatmul.mubr.bf16.gmra.mrb[0].mxu0 %v728
  %v963 = vpop.f32.mrb[0].mxu0
  %v964 = vadd.f32 0.0, %v963
  %v965 = vpop.f32.mrb[0].mxu0
  %v966 = vpop.f32.mrb[0].mxu0
  %v967 = vadd.f32 0.0, %v966
  %v968 = vpop.f32.mrb[0].mxu0
  %969 = vmatprep.mubr.bf16.mxu0 %v732
  %970 = vmatmul.mubr.bf16.gmra.mrb[0].mxu0 %v731
  %v971 = vpop.f32.mrb[0].mxu0
  %v972 = vadd.f32 0.0, %v971
  %v973 = vpop.f32.mrb[0].mxu0
  %v974 = vpop.f32.mrb[0].mxu0
  %v975 = vadd.f32 0.0, %v974
  %v976 = vpop.f32.mrb[0].mxu0
  %977 = vmatprep.mubr.bf16.mxu0 %v735
  %978 = vmatmul.mubr.bf16.gmra.mrb[0].mxu0 %v734
  %v979 = vpop.f32.mrb[0].mxu0
  %v980 = vadd.f32 0.0, %v979
  %v981 = vpop.f32.mrb[0].mxu0
  %v982 = vpop.f32.mrb[0].mxu0
  %v983 = vpop.f32.mrb[0].mxu0
  %984 = vdwg.mxu0
  %985 = vmatprep.subr.bf16.mxu0 0
  %986 = vmatpush1.bf16.msra.mxu0 %v897
  %987 = vmatprep.subr.bf16.mxu0 0
  %988 = vmatpush1.bf16.msra.mxu0 %v898
  %989 = vmatprep.subr.bf16.mxu0 0
  %990 = vmatpush1.bf16.msra.mxu0 %v899
  %991 = vmatprep.subr.bf16.mxu0 0
  %992 = vmatpush1.bf16.msra.mxu0 %v900
  %993 = vmatprep.subr.bf16.mxu0 0
  %994 = vmatpush1.bf16.msra.mxu0 %v901
  %995 = vmatprep.subr.bf16.mxu0 0
  %996 = vmatpush1.bf16.msra.mxu0 %v902
  %997 = vmatprep.subr.bf16.mxu0 0
  %998 = vmatpush1.bf16.msra.mxu0 %v903
  %999 = vmatprep.subr.bf16.mxu0 0
  %1000 = vmatpush1.bf16.msra.mxu0 %v904
  %1001 = vmatprep.subr.bf16.mxu0 0
  %1002 = vmatpush1.bf16.msra.mxu0 0
  %1003 = vmatprep.subr.bf16.mxu0 0
  %1004 = vmatpush1.bf16.msra.mxu0 0
  %1005 = vmatprep.subr.bf16.mxu0 0
  %1006 = vmatpush1.bf16.msra.mxu0 0
  %1007 = vmatprep.subr.bf16.mxu0 0
  %1008 = vmatpush1.bf16.msra.mxu0 0
  %1009 = vmatprep.subr.bf16.mxu0 0
  %1010 = vmatpush1.bf16.msra.mxu0 0
  %1011 = vmatprep.subr.bf16.mxu0 0
  %1012 = vmatpush1.bf16.msra.mxu0 0
  %1013 = vmatprep.subr.bf16.mxu0 0
  %1014 = vmatpush1.bf16.msra.mxu0 0
  %1015 = vmatprep.subr.bf16.mxu0 0
  %1016 = vmatpush1.bf16.msra.mxu0 0
  %1017 = vmatprep.mubr.bf16.mxu0 0
  %1018 = vmatmul.mubr.bf16.gmra.mrb[0].mxu0 %v730
  %v1019 = vpop.f32.mrb[0].mxu0
  %v1020 = vadd.f32 %v964, %v1019
  %v1021 = vpop.f32.mrb[0].mxu0
  %v1022 = vpop.f32.mrb[0].mxu0
  %v1023 = vadd.f32 %v967, %v1022
  %v1024 = vpop.f32.mrb[0].mxu0
  %1025 = vmatprep.mubr.bf16.mxu0 0
  %1026 = vmatmul.mubr.bf16.gmra.mrb[0].mxu0 %v733
  %v1027 = vpop.f32.mrb[0].mxu0
  %v1028 = vadd.f32 %v972, %v1027
  %v1029 = vpop.f32.mrb[0].mxu0
  %v1030 = vpop.f32.mrb[0].mxu0
  %v1031 = vadd.f32 %v975, %v1030
  %v1032 = vpop.f32.mrb[0].mxu0
  %1033 = vmatprep.mubr.bf16.mxu0 0
  %1034 = vmatmul.mubr.bf16.gmra.mrb[0].mxu0 %v736
  %v1035 = vpop.f32.mrb[0].mxu0
  %v1036 = vadd.f32 %v980, %v1035
  %v1037 = vpop.f32.mrb[0].mxu0
  %v1038 = vpop.f32.mrb[0].mxu0
  %v1039 = vpop.f32.mrb[0].mxu0
  %1040 = vdwg.mxu0
  %v1041 = vld [vmem:[%s5] sm:$0x1]
  %v1042 = vld [vmem:[%s6] sm:$0x1]
  %v1043 = vsel %vm132, %v1020, 0.0
  %v1044 = vsel %vm133, %v1023, 0.0
  %v1045 = vsel %vm134, %v1028, 0.0
  %v1046 = vsel %vm135, %v1031, 0.0
  %v1047 = vsel %vm136, %v1036, 0.0
  %v1048 = vadd.f32 %v1043, %v1044
  %v1049 = vadd.f32 %v1048, %v1045
  %v1050 = vadd.f32 %v1049, %v1046
  %v1051 = vsel %vm489, %v1047, 0.0
  %v1052 = vadd.f32 %v1050, %v1051
  %v1053 = vrot.slane %v1052, 4
  %v1054 = vadd.f32 %v1052, %v1053
  %v1055 = vrot.slane %v1054, 2
  %v1056 = vadd.f32 %v1054, %v1055
  %v1057 = vrot.slane %v1056, 1
  %v1058 = vadd.f32 %v1056, %v1057
  %1059 = vmatprep.subr.mxu0 0.0
  %1060 = vmatpush1.msra.mxu0 %v30
  %1061 = vmatprep.subr.mxu0 0.0
  %1062 = vmatpush1.msra.mxu0 %v31
  %1063 = vmatprep.subr.mxu0 0.0
  %1064 = vmatpush1.msra.mxu0 %v32
  %1065 = vmatprep.subr.mxu0 0.0
  %1066 = vmatpush1.msra.mxu0 %v33
  %1067 = vmatprep.subr.mxu0 0.0
  %1068 = vmatpush1.msra.mxu0 %v34
  %1069 = vmatprep.subr.mxu0 0.0
  %1070 = vmatpush1.msra.mxu0 %v35
  %1071 = vmatprep.subr.mxu0 0.0
  %1072 = vmatpush1.msra.mxu0 %v36
  %1073 = vmatprep.subr.mxu0 0.0
  %1074 = vmatpush1.msra.mxu0 %v37
  %1075 = vmatprep.subr.mxu0 0.0
  %1076 = vmatpush1.msra.mxu0 %v38
  %1077 = vmatprep.subr.mxu0 0.0
  %1078 = vmatpush1.msra.mxu0 %v39
  %1079 = vmatprep.subr.mxu0 0.0
  %1080 = vmatpush1.msra.mxu0 %v40
  %1081 = vmatprep.subr.mxu0 0.0
  %1082 = vmatpush1.msra.mxu0 %v41
  %1083 = vmatprep.subr.mxu0 0.0
  %1084 = vmatpush1.msra.mxu0 %v42
  %1085 = vmatprep.subr.mxu0 0.0
  %1086 = vmatpush1.msra.mxu0 %v43
  %1087 = vmatprep.subr.mxu0 0.0
  %1088 = vmatpush1.msra.mxu0 %v44
  %1089 = vmatprep.subr.mxu0 0.0
  %1090 = vmatpush1.msra.mxu0 %v45
  %1091 = vmatprep.subr.mxu0 0.0
  %1092 = vmatpush1.msra.mxu0 0.0
  %1093 = vmatprep.subr.mxu0 0.0
  %1094 = vmatpush1.msra.mxu0 0.0
  %1095 = vmatprep.subr.mxu0 0.0
  %1096 = vmatpush1.msra.mxu0 0.0
  %1097 = vmatprep.subr.mxu0 0.0
  %1098 = vmatpush1.msra.mxu0 0.0
  %1099 = vmatprep.subr.mxu0 0.0
  %1100 = vmatpush1.msra.mxu0 0.0
  %1101 = vmatprep.subr.mxu0 0.0
  %1102 = vmatpush1.msra.mxu0 0.0
  %1103 = vmatprep.subr.mxu0 0.0
  %1104 = vmatpush1.msra.mxu0 0.0
  %1105 = vmatprep.subr.mxu0 0.0
  %1106 = vmatpush1.msra.mxu0 0.0
  %1107 = vmatprep.subr.mxu0 0.0
  %1108 = vmatpush1.msra.mxu0 0.0
  %1109 = vmatprep.subr.mxu0 0.0
  %1110 = vmatpush1.msra.mxu0 0.0
  %1111 = vmatprep.subr.mxu0 0.0
  %1112 = vmatpush1.msra.mxu0 0.0
  %1113 = vmatprep.subr.mxu0 0.0
  %1114 = vmatpush1.msra.mxu0 0.0
  %1115 = vmatprep.subr.mxu0 0.0
  %1116 = vmatpush1.msra.mxu0 0.0
  %1117 = vmatprep.subr.mxu0 0.0
  %1118 = vmatpush1.msra.mxu0 0.0
  %1119 = vmatprep.subr.mxu0 0.0
  %1120 = vmatpush1.msra.mxu0 0.0
  %1121 = vmatprep.subr.mxu0 0.0
  %1122 = vmatpush1.msra.mxu0 0.0
  %1123 = vmatprep.mubr.f32.mxu0 0.0
  %1124 = vmatmul.mubr.f32.gmra.mrb[0].mxu0 %v1058
  %v1125 = vpop.f32.mrb[0].mxu0
  %v1126 = vadd.f32 0.0, %v1125
  %v1127 = vpop.f32.mrb[0].mxu0
  %1128 = vdwg.mxu0
  %v1129 = vmul.f32 %v1126, 0.001953125
  %v1130 = vlaneseq
  %v1131 = vshrl.u32 %v1130, 7
  %v1132 = vsub.s32 0, %v1131
  %v1133 = vrot.slane %v1129, %v1132
  %v1134 = vsub.f32 %v1020, %v1133
  %v1135 = vsub.f32 %v1023, %v1133
  %v1136 = vsub.f32 %v1028, %v1133
  %v1137 = vsub.f32 %v1031, %v1133
  %v1138 = vsub.f32 %v1036, %v1133
  %v1139 = vsel %vm132, %v1134, 0.0
  %v1140 = vsel %vm133, %v1135, 0.0
  %v1141 = vsel %vm134, %v1136, 0.0
  %v1142 = vsel %vm135, %v1137, 0.0
  %v1143 = vsel %vm136, %v1138, 0.0
  %v1144 = vmul.f32 %v1139, %v1139
  %v1145 = vmul.f32 %v1140, %v1140
  %v1146 = vmul.f32 %v1141, %v1141
  %v1147 = vmul.f32 %v1142, %v1142
  %v1148 = vmul.f32 %v1143, %v1143
  %v1149 = vadd.f32 %v1144, %v1145
  %v1150 = vadd.f32 %v1149, %v1146
  %v1151 = vadd.f32 %v1150, %v1147
  %v1152 = vsel %vm489, %v1148, 0.0
  %v1153 = vadd.f32 %v1151, %v1152
  %v1154 = vrot.slane %v1153, 4
  %v1155 = vadd.f32 %v1153, %v1154
  %v1156 = vrot.slane %v1155, 2
  %v1157 = vadd.f32 %v1155, %v1156
  %v1158 = vrot.slane %v1157, 1
  %v1159 = vadd.f32 %v1157, %v1158
  %1160 = vmatprep.subr.mxu0 0.0
  %1161 = vmatpush1.msra.mxu0 %v30
  %1162 = vmatprep.subr.mxu0 0.0
  %1163 = vmatpush1.msra.mxu0 %v31
  %1164 = vmatprep.subr.mxu0 0.0
  %1165 = vmatpush1.msra.mxu0 %v32
  %1166 = vmatprep.subr.mxu0 0.0
  %1167 = vmatpush1.msra.mxu0 %v33
  %1168 = vmatprep.subr.mxu0 0.0
  %1169 = vmatpush1.msra.mxu0 %v34
  %1170 = vmatprep.subr.mxu0 0.0
  %1171 = vmatpush1.msra.mxu0 %v35
  %1172 = vmatprep.subr.mxu0 0.0
  %1173 = vmatpush1.msra.mxu0 %v36
  %1174 = vmatprep.subr.mxu0 0.0
  %1175 = vmatpush1.msra.mxu0 %v37
  %1176 = vmatprep.subr.mxu0 0.0
  %1177 = vmatpush1.msra.mxu0 %v38
  %1178 = vmatprep.subr.mxu0 0.0
  %1179 = vmatpush1.msra.mxu0 %v39
  %1180 = vmatprep.subr.mxu0 0.0
  %1181 = vmatpush1.msra.mxu0 %v40
  %1182 = vmatprep.subr.mxu0 0.0
  %1183 = vmatpush1.msra.mxu0 %v41
  %1184 = vmatprep.subr.mxu0 0.0
  %1185 = vmatpush1.msra.mxu0 %v42
  %1186 = vmatprep.subr.mxu0 0.0
  %1187 = vmatpush1.msra.mxu0 %v43
  %1188 = vmatprep.subr.mxu0 0.0
  %1189 = vmatpush1.msra.mxu0 %v44
  %1190 = vmatprep.subr.mxu0 0.0
  %1191 = vmatpush1.msra.mxu0 %v45
  %1192 = vmatprep.subr.mxu0 0.0
  %1193 = vmatpush1.msra.mxu0 0.0
  %1194 = vmatprep.subr.mxu0 0.0
  %1195 = vmatpush1.msra.mxu0 0.0
  %1196 = vmatprep.subr.mxu0 0.0
  %1197 = vmatpush1.msra.mxu0 0.0
  %1198 = vmatprep.subr.mxu0 0.0
  %1199 = vmatpush1.msra.mxu0 0.0
  %1200 = vmatprep.subr.mxu0 0.0
  %1201 = vmatpush1.msra.mxu0 0.0
  %1202 = vmatprep.subr.mxu0 0.0
  %1203 = vmatpush1.msra.mxu0 0.0
  %1204 = vmatprep.subr.mxu0 0.0
  %1205 = vmatpush1.msra.mxu0 0.0
  %1206 = vmatprep.subr.mxu0 0.0
  %1207 = vmatpush1.msra.mxu0 0.0
  %1208 = vmatprep.subr.mxu0 0.0
  %1209 = vmatpush1.msra.mxu0 0.0
  %1210 = vmatprep.subr.mxu0 0.0
  %1211 = vmatpush1.msra.mxu0 0.0
  %1212 = vmatprep.subr.mxu0 0.0
  %1213 = vmatpush1.msra.mxu0 0.0
  %1214 = vmatprep.subr.mxu0 0.0
  %1215 = vmatpush1.msra.mxu0 0.0
  %1216 = vmatprep.subr.mxu0 0.0
  %1217 = vmatpush1.msra.mxu0 0.0
  %1218 = vmatprep.subr.mxu0 0.0
  %1219 = vmatpush1.msra.mxu0 0.0
  %1220 = vmatprep.subr.mxu0 0.0
  %1221 = vmatpush1.msra.mxu0 0.0
  %1222 = vmatprep.subr.mxu0 0.0
  %1223 = vmatpush1.msra.mxu0 0.0
  %1224 = vmatprep.mubr.f32.mxu0 0.0
  %1225 = vmatmul.mubr.f32.gmra.mrb[0].mxu0 %v1159
  %v1226 = vpop.f32.mrb[0].mxu0
  %v1227 = vadd.f32 0.0, %v1226
  %v1228 = vpop.f32.mrb[0].mxu0
  %1229 = vdwg.mxu0
  %v1230 = vmul.f32 %v1227, 0.001953125
  %v1231 = vadd.f32 %v1230, 1e-05
  %v1232 = vrsqrt.pop %v1231
  %v1233 = vmul.f32 %v1232, %v1041
  %v1234 = vlaneseq
  %v1235 = vshrl.u32 %v1234, 7
  %v1236 = vsub.s32 0, %v1235
  %v1237 = vrot.slane %v1233, %v1236
  %v1238 = vmul.f32 %v1020, %v1237
  %v1239 = vmul.f32 %v1023, %v1237
  %v1240 = vmul.f32 %v1028, %v1237
  %v1241 = vmul.f32 %v1031, %v1237
  %v1242 = vmul.f32 %v1036, %v1237
  %v1243 = vmul.f32 %v1129, %v1233
  %v1244 = vsub.f32 %v1042, %v1243
  %v1246 = vlaneseq
  %v1247 = vshrl.u32 %v1246, 7
  %v1248 = vsub.s32 0, %v1247
  %v1249 = vrot.slane %v1244, %v1248
  %v1251 = vadd.f32 %v1238, %v1249
  %v1252 = vadd.f32 %v1239, %v1249
  %v1253 = vadd.f32 %v1240, %v1249
  %v1254 = vadd.f32 %v1241, %v1249
  %v1255 = vadd.f32 %v1242, %v1249
  %1256 = vst [vmem:[#allocation3] sm:$0xff] %v1251
  %1257 = vst [vmem:[#allocation3 + $0x8] sm:$0xff] %v1252
  %1258 = vst [vmem:[#allocation3 + $0x10] sm:$0xff] %v1253
  %1259 = vst [vmem:[#allocation3 + $0x18] sm:$0xff] %v1254
  %1260 = vst [vmem:[#allocation3 + $0x20] sm:$0x3] %v1255
  %v1261 = vld [vmem:[#allocation3] sm:$0xff]
  %v1262 = vld [vmem:[#allocation3 + $0x8] sm:$0xff]
  %v1263 = vld [vmem:[%s0] sm:$0xff]
  %v1264 = vld [vmem:[%s0 + $0x8] sm:$0xff]
  %v1265 = vadd.f32 %v1261, %v1263
  %v1266 = vadd.f32 %v1262, %v1264
  %v1267 = vmax.f32 %v1265, 0.0
  %v1268 = vmax.f32 %v1266, 0.0
  %1269 = vst [vmem:[%s8] sm:$0xff] %v1267
  %1270 = vst [vmem:[%s8 + $0x8] sm:$0xff] %v1268
  %v1271 = vld [vmem:[#allocation3 + $0x12] sm:$0xff]
  %v1272 = vld [vmem:[#allocation3 + $0x1a] sm:$0xff]
  %v1273 = vld [vmem:[%s146] sm:$0xff]
  %v1274 = vld [vmem:[%s146 + $0x8] sm:$0xff]
  %v1275 = vadd.f32 %v1271, %v1273
  %v1276 = vadd.f32 %v1272, %v1274
  %v1277 = vmax.f32 %v1275, 0.0
  %v1278 = vmax.f32 %v1276, 0.0
  %s1279 = scalar_lea.vmem %s8, 16
  %1280 = vst [vmem:[%s1279] sm:$0xff] %v1277
  %1281 = vst [vmem:[%s1279 + $0x8] sm:$0xff] %v1278
  // Predicated region
  $region34: #{resblock_forward.1} parent=0 // pred_check
    _
  $region35: #{resblock_forward.1} parent=0 // pred_check_branch
    %1283 = sbr.rel (0) target = $region37
  $region36: #{resblock_forward.1} parent=0 // pred_region
    _
  $region37: #{resblock_forward.1} parent=0 // pred_fallthru
    _
  // Predicated region
  $region38: #{resblock_forward.1} parent=0 // pred_check
    _
  $region39: #{resblock_forward.1} parent=0 // pred_check_branch
    %1285 = sbr.rel (0) target = $region41
  $region40: #{resblock_forward.1} parent=0 // pred_region
    _
  $region41: #{resblock_forward.1} parent=0 // pred_fallthru
    _

</llo_original>
